<compile_context>
chip_gen: v5e
topology: v5e:2x2
jax: 0.10.0
libtpu: 0.0.40
codegen_flags: <defaults>
</compile_context>

<pallas_src>
import math
import functools

import jax
import jax.numpy as jnp
from jax import lax
from jax.experimental import pallas as pl
from jax.experimental.pallas import tpu as pltpu


# ----------------------------- tiled linear projection kernel -----------------------------

def linear_kernel(x_ref, w_ref, b_ref, o_ref):
    # x: (tm, Hin), w: (Hout, Hin) [torch nn.Linear layout], b: (1, Hout)
    acc = lax.dot_general(
        x_ref[...], w_ref[...],
        dimension_numbers=(((1,), (1,)), ((), ())),   # x @ W^T, no explicit transpose
        preferred_element_type=jnp.float32)
    o_ref[...] = (acc + b_ref[...].astype(jnp.float32)).astype(o_ref.dtype)


def linear(x, w, b, *, block_m=256):
    """x: (M, Hin); w: (Hout, Hin); b: (Hout,). Tiled + pipelined over M."""
    M, Hin = x.shape
    Hout = w.shape[0]
    # Biggest row tile that pipelines well; full-array block for small M (keeps the
    # (8,128) "block equals full dim" escape hatch valid for toy shapes).
    tm = block_m if M >= block_m else M
    grid_m = pl.cdiv(M, tm)
    return pl.pallas_call(
        linear_kernel,
        out_shape=jax.ShapeDtypeStruct((M, Hout), x.dtype),
        grid_spec=pl.GridSpec(
            grid=(grid_m,),
            in_specs=[
                pl.BlockSpec((tm, Hin), lambda i: (i, 0)),
                pl.BlockSpec((Hout, Hin), lambda i: (0, 0)),
                pl.BlockSpec((1, Hout), lambda i: (0, 0)),
            ],
            out_specs=pl.BlockSpec((tm, Hout), lambda i: (i, 0)),
        ),
        compiler_params=pltpu.CompilerParams(
            dimension_semantics=("parallel",)),
    )(x, w, b.reshape(1, Hout))


# ----------------------------- attention kernels -----------------------------

def _mha(q, k, v, mask, num_heads, head_dim, out_dtype):
    """Multi-head scaled-dot-product attention on one batch element.

    q: (L, H) — already pre-scaled by 1/sqrt(head_dim) (folded into the projection).
    k, v: (S, H) in input dtype (fed to the MXU as-is, f32 accumulation).
    mask: (1, S) additive, f32.
    Returns head-merged (L, H) in out_dtype (lane-dense).
    """
    ctx_heads = []
    for h in range(num_heads):            # unrolled: no per-head grid-step overhead
        lo = h * head_dim
        hi = lo + head_dim
        qh = q[:, lo:hi]                   # (L, dH)
        kh = k[:, lo:hi]                   # (S, dH)
        vh = v[:, lo:hi]                   # (S, dH)
        s = lax.dot_general(               # QK^T without an explicit K transpose
            qh, kh,
            dimension_numbers=(((1,), (1,)), ((), ())),
            preferred_element_type=jnp.float32)          # (L, S), f32
        s = s + mask                                      # additive BERT-style mask
        s = s - jnp.max(s, axis=-1, keepdims=True)        # stable softmax (f32)
        p = jnp.exp(s)
        p = p * pl.reciprocal(jnp.sum(p, axis=-1, keepdims=True), approx=True)
        # attention-prob dropout: identity in eval mode
        ctx_heads.append(
            jnp.dot(p.astype(vh.dtype), vh, preferred_element_type=jnp.float32))
    return jnp.concatenate(ctx_heads, axis=-1).astype(out_dtype)   # (L, H)


def attn_dual_kernel(tq_ref, kvq_ref, m_ref, task_o_ref, text_o_ref,
                     *, num_heads, head_dim):
    # tq:  (1, T, H)          task queries (pre-scaled)
    # kvq: (1, S, 3H)         fused [key | value | text_query(pre-scaled)] projections
    # m:   (1, 1, S)          additive mask
    H = num_heads * head_dim
    kvq = kvq_ref[0]                   # (S, 3H)
    k = kvq[:, 0:H]
    v = kvq[:, H:2 * H]
    text_q = kvq[:, 2 * H:3 * H]
    mask = m_ref[0].astype(jnp.float32)   # (1, S)

    # K/V (and mask) stay resident in VMEM and are reused for both query sets.
    task_o_ref[0] = _mha(tq_ref[0], k, v, mask, num_heads, head_dim, task_o_ref.dtype)
    text_o_ref[0] = _mha(text_q, k, v, mask, num_heads, head_dim, text_o_ref.dtype)


def attn_single_kernel(tq_ref, kv_ref, m_ref, task_o_ref, *, num_heads, head_dim):
    H = num_heads * head_dim
    kv = kv_ref[0]                     # (S, 2H)
    k = kv[:, 0:H]
    v = kv[:, H:2 * H]
    mask = m_ref[0].astype(jnp.float32)
    task_o_ref[0] = _mha(tq_ref[0], k, v, mask, num_heads, head_dim, task_o_ref.dtype)


def attention_dual(task_q, kvq, mask3, *, num_heads, head_dim):
    """task_q: (B, T, H); kvq: (B, S, 3H); mask3: (B, 1, S)."""
    B, T, H = task_q.shape
    S = kvq.shape[1]
    kernel = functools.partial(attn_dual_kernel, num_heads=num_heads, head_dim=head_dim)
    return pl.pallas_call(
        kernel,
        out_shape=(jax.ShapeDtypeStruct((B, T, H), task_q.dtype),
                   jax.ShapeDtypeStruct((B, S, H), kvq.dtype)),
        grid_spec=pl.GridSpec(
            grid=(B,),
            in_specs=[
                pl.BlockSpec((1, T, H), lambda b: (b, 0, 0)),
                pl.BlockSpec((1, S, 3 * H), lambda b: (b, 0, 0)),
                pl.BlockSpec((1, 1, S), lambda b: (b, 0, 0)),
            ],
            out_specs=[
                pl.BlockSpec((1, T, H), lambda b: (b, 0, 0)),
                pl.BlockSpec((1, S, H), lambda b: (b, 0, 0)),
            ],
        ),
        compiler_params=pltpu.CompilerParams(dimension_semantics=("parallel",)),
    )(task_q, kvq, mask3)


def attention_single(task_q, kv, mask3, *, num_heads, head_dim):
    """task_q: (B, T, H); kv: (B, S, 2H); mask3: (B, 1, S)."""
    B, T, H = task_q.shape
    S = kv.shape[1]
    kernel = functools.partial(attn_single_kernel, num_heads=num_heads, head_dim=head_dim)
    return pl.pallas_call(
        kernel,
        out_shape=jax.ShapeDtypeStruct((B, T, H), task_q.dtype),
        grid_spec=pl.GridSpec(
            grid=(B,),
            in_specs=[
                pl.BlockSpec((1, T, H), lambda b: (b, 0, 0)),
                pl.BlockSpec((1, S, 2 * H), lambda b: (b, 0, 0)),
                pl.BlockSpec((1, 1, S), lambda b: (b, 0, 0)),
            ],
            out_specs=pl.BlockSpec((1, T, H), lambda b: (b, 0, 0)),
        ),
        compiler_params=pltpu.CompilerParams(dimension_semantics=("parallel",)),
    )(task_q, kv, mask3)


# ----------------------------- module wrapper -----------------------------

def m2dpr_cross_attention(params, task_reprs, hidden_states, attention_mask=None,
                          *, num_heads, extra_text_query=True):
    B, T, H = task_reprs.shape
    _, S, _ = hidden_states.shape
    dH = H // num_heads
    scale = 1.0 / math.sqrt(dH)
    dtype = hidden_states.dtype

    if attention_mask is None:
        mask3 = jnp.zeros((B, 1, S), dtype=dtype)
    else:
        mask3 = attention_mask.reshape(B, 1, S)

    # Fold 1/sqrt(dH) into the query projections (exactly equivalent to scaling scores).
    qw = params["query_w"] * scale
    qb = params["query_b"] * scale

    # Fused projection over hidden_states: read the activation from HBM once.
    if extra_text_query:
        w_kv = jnp.concatenate(
            [params["key_w"], params["value_w"], params["text_query_w"] * scale], axis=0)
        b_kv = jnp.concatenate(
            [params["key_b"], params["value_b"], params["text_query_b"] * scale], axis=0)
    else:
        w_kv = jnp.concatenate([params["key_w"], params["value_w"]], axis=0)
        b_kv = jnp.concatenate([params["key_b"], params["value_b"]], axis=0)

    kvq = linear(hidden_states.reshape(B * S, H), w_kv, b_kv).reshape(B, S, -1)
    task_q = linear(task_reprs.reshape(B * T, H), qw, qb).reshape(B, T, H)

    if extra_text_query:
        task_ctx, text_ctx = attention_dual(task_q, kvq, mask3,
                                            num_heads=num_heads, head_dim=dH)
        return task_ctx, text_ctx
    else:
        task_ctx = attention_single(task_q, kvq, mask3,
                                    num_heads=num_heads, head_dim=dH)
        return task_ctx, None


# ----------------------------- pure-JAX reference for sanity check -----------------------------

def _transpose_for_scores(x, num_heads, head_dim):
    B, L, _ = x.shape
    return jnp.transpose(x.reshape(B, L, num_heads, head_dim), (0, 2, 1, 3))


def _merge_heads(x):
    B, nH, L, dH = x.shape
    return jnp.transpose(x, (0, 2, 1, 3)).reshape(B, L, nH * dH)


def reference(params, task_reprs, hidden_states, attention_mask, num_heads):
    H = hidden_states.shape[-1]
    dH = H // num_heads

    def lin(x, w, b):
        return x @ w.T + b

    def sdpa(q, k, v, mask):
        s = jnp.einsum("bhqd,bhkd->bhqk", q, k) / math.sqrt(dH) + mask
        p = jax.nn.softmax(s, axis=-1)
        return jnp.einsum("bhqk,bhkd->bhqd", p, v)

    k = _transpose_for_scores(lin(hidden_states, params["key_w"], params["key_b"]), num_heads, dH)
    v = _transpose_for_scores(lin(hidden_states, params["value_w"], params["value_b"]), num_heads, dH)
    q = _transpose_for_scores(lin(task_reprs, params["query_w"], params["query_b"]), num_heads, dH)
    tq = _transpose_for_scores(lin(hidden_states, params["text_query_w"], params["text_query_b"]),
                               num_heads, dH)
    return _merge_heads(sdpa(q, k, v, attention_mask)), _merge_heads(sdpa(tq, k, v, attention_mask))


# ----------------------------- main -----------------------------

if __name__ == "__main__":
    # Small config consistent with the module: hidden_size=32, num_attention_heads=4
    B, T, S, H, NH = 2, 4, 8, 32, 4

    key0 = jax.random.PRNGKey(0)
    ks = jax.random.split(key0, 12)
    std = 0.02

    params = {
        "query_w": std * jax.random.normal(ks[0], (H, H), jnp.float32),
        "query_b": std * jax.random.normal(ks[1], (H,), jnp.float32),
        "text_query_w": std * jax.random.normal(ks[2], (H, H), jnp.float32),
        "text_query_b": std * jax.random.normal(ks[3], (H,), jnp.float32),
        "key_w": std * jax.random.normal(ks[4], (H, H), jnp.float32),
        "key_b": std * jax.random.normal(ks[5], (H,), jnp.float32),
        "value_w": std * jax.random.normal(ks[6], (H, H), jnp.float32),
        "value_b": std * jax.random.normal(ks[7], (H,), jnp.float32),
    }

    task_reprs = jax.random.normal(ks[8], (B, T, H), jnp.float32)
    hidden_states = jax.random.normal(ks[9], (B, S, H), jnp.float32)

    # BERT-style additive mask: 0 for valid tokens, -1e4 for padded (mask last 2 tokens of batch 1)
    valid = jnp.ones((B, S), jnp.float32).at[1, -2:].set(0.0)
    attention_mask = (1.0 - valid)[:, None, None, :] * -10000.0

    fwd = jax.jit(functools.partial(m2dpr_cross_attention,
                                    num_heads=NH, extra_text_query=True))
    task_ctx, text_ctx = fwd(params, task_reprs, hidden_states, attention_mask)
    jax.block_until_ready((task_ctx, text_ctx))

    ref_task, ref_text = reference(params, task_reprs, hidden_states, attention_mask, NH)
    assert task_ctx.shape == (B, T, H)
    assert text_ctx.shape == (B, S, H)
    # Tolerance accounts for the approximate (EUP) reciprocal in the softmax denominator.
    assert jnp.allclose(task_ctx, ref_task, atol=1e-3, rtol=1e-3)
    assert jnp.allclose(text_ctx, ref_text, atol=1e-3, rtol=1e-3)

    print("KERNEL_OK")
</pallas_src>

<mosaic_0001>
module attributes {stable_mosaic.version = 11 : i64} {
  func.func @linear_kernel(%arg0: i32, %arg1: memref<8x32xf32, #tpu.memory_space<vmem>>, %arg2: memref<32x32xf32, #tpu.memory_space<vmem>>, %arg3: memref<1x32xf32, #tpu.memory_space<vmem>>, %arg4: memref<8x32xf32, #tpu.memory_space<vmem>>) attributes {dimension_semantics = [#tpu.dimension_semantics<parallel>], iteration_bounds = array<i64: 1>, scalar_prefetch = 0 : i64, scratch_operands = 0 : i64, tpu.core_type = #tpu.core_type<tc>, window_params = [{transform_indices = @transform_0, window_bounds = array<i64: 8, 32>}, {pipeline_mode = #tpu.pipeline_mode<synchronous>, transform_indices = @transform_1, window_bounds = array<i64: 32, 32>}, {pipeline_mode = #tpu.pipeline_mode<synchronous>, transform_indices = @transform_2, window_bounds = array<i64: 1, 32>}, {transform_indices = @transform_3, window_bounds = array<i64: 8, 32>}]} {
    %c0 = arith.constant 0 : index
    %c0_0 = arith.constant 0 : index
    %0 = vector.load %arg1[%c0, %c0_0] : memref<8x32xf32, #tpu.memory_space<vmem>>, vector<8x32xf32>
    %c0_1 = arith.constant 0 : index
    %c0_2 = arith.constant 0 : index
    %1 = vector.load %arg2[%c0_1, %c0_2] : memref<32x32xf32, #tpu.memory_space<vmem>>, vector<32x32xf32>
    %cst = arith.constant dense<0.000000e+00> : vector<8x32xf32>
    %2 = tpu.matmul %0, %1, %cst {dimension_numbers = #tpu.dot_dimension_numbers<[1], [1], [0], [0], [0, 0, 1, 0], [], []>} : vector<8x32xf32>, vector<32x32xf32>, vector<8x32xf32> -> vector<8x32xf32>
    %c0_3 = arith.constant 0 : index
    %c0_4 = arith.constant 0 : index
    %3 = vector.load %arg3[%c0_3, %c0_4] : memref<1x32xf32, #tpu.memory_space<vmem>>, vector<1x32xf32>
    %4 = vector.broadcast %3 : vector<1x32xf32> to vector<8x32xf32>
    %5 = arith.addf %2, %4 : vector<8x32xf32>
    %c0_5 = arith.constant 0 : index
    %c0_6 = arith.constant 0 : index
    %6 = vector.load %arg4[%c0_5, %c0_6] : memref<8x32xf32, #tpu.memory_space<vmem>>, vector<8x32xf32>
    tpu.vector_store %arg4[%c0_5, %c0_6], %5 {strides = array<i32>} : memref<8x32xf32, #tpu.memory_space<vmem>>, vector<8x32xf32>,
    return
  }
  func.func @transform_0(%arg0: i32) -> (i32, i32) {
    %c0_i32 = arith.constant 0 : i32
    %c0_i32_0 = arith.constant 0 : i32
    return %arg0, %c0_i32 : i32, i32
  }
  func.func @transform_1(%arg0: i32) -> (i32, i32) {
    %c0_i32 = arith.constant 0 : i32
    %c0_i32_0 = arith.constant 0 : i32
    %c0_i32_1 = arith.constant 0 : i32
    return %c0_i32, %c0_i32_0 : i32, i32
  }
  func.func @transform_2(%arg0: i32) -> (i32, i32) {
    %c0_i32 = arith.constant 0 : i32
    %c0_i32_0 = arith.constant 0 : i32
    %c0_i32_1 = arith.constant 0 : i32
    return %c0_i32, %c0_i32_0 : i32, i32
  }
  func.func @transform_3(%arg0: i32) -> (i32, i32) {
    %c0_i32 = arith.constant 0 : i32
    %c0_i32_0 = arith.constant 0 : i32
    return %arg0, %c0_i32 : i32, i32
  }
}

module attributes {stable_mosaic.version = 11 : i64} {
  func.func @linear_kernel(%arg0: i32, %arg1: memref<16x32xf32, #tpu.memory_space<vmem>>, %arg2: memref<96x32xf32, #tpu.memory_space<vmem>>, %arg3: memref<1x96xf32, #tpu.memory_space<vmem>>, %arg4: memref<16x96xf32, #tpu.memory_space<vmem>>) attributes {dimension_semantics = [#tpu.dimension_semantics<parallel>], iteration_bounds = array<i64: 1>, scalar_prefetch = 0 : i64, scratch_operands = 0 : i64, tpu.core_type = #tpu.core_type<tc>, window_params = [{transform_indices = @transform_0, window_bounds = array<i64: 16, 32>}, {pipeline_mode = #tpu.pipeline_mode<synchronous>, transform_indices = @transform_1, window_bounds = array<i64: 96, 32>}, {pipeline_mode = #tpu.pipeline_mode<synchronous>, transform_indices = @transform_2, window_bounds = array<i64: 1, 96>}, {transform_indices = @transform_3, window_bounds = array<i64: 16, 96>}]} {
    %c0 = arith.constant 0 : index
    %c0_0 = arith.constant 0 : index
    %0 = vector.load %arg1[%c0, %c0_0] : memref<16x32xf32, #tpu.memory_space<vmem>>, vector<16x32xf32>
    %c0_1 = arith.constant 0 : index
    %c0_2 = arith.constant 0 : index
    %1 = vector.load %arg2[%c0_1, %c0_2] : memref<96x32xf32, #tpu.memory_space<vmem>>, vector<96x32xf32>
    %cst = arith.constant dense<0.000000e+00> : vector<16x96xf32>
    %2 = tpu.matmul %0, %1, %cst {dimension_numbers = #tpu.dot_dimension_numbers<[1], [1], [0], [0], [0, 0, 1, 0], [], []>} : vector<16x32xf32>, vector<96x32xf32>, vector<16x96xf32> -> vector<16x96xf32>
    %c0_3 = arith.constant 0 : index
    %c0_4 = arith.constant 0 : index
    %3 = vector.load %arg3[%c0_3, %c0_4] : memref<1x96xf32, #tpu.memory_space<vmem>>, vector<1x96xf32>
    %4 = vector.broadcast %3 : vector<1x96xf32> to vector<16x96xf32>
    %5 = arith.addf %2, %4 : vector<16x96xf32>
    %c0_5 = arith.constant 0 : index
    %c0_6 = arith.constant 0 : index
    %6 = vector.load %arg4[%c0_5, %c0_6] : memref<16x96xf32, #tpu.memory_space<vmem>>, vector<16x96xf32>
    tpu.vector_store %arg4[%c0_5, %c0_6], %5 {strides = array<i32>} : memref<16x96xf32, #tpu.memory_space<vmem>>, vector<16x96xf32>,
    return
  }
  func.func @transform_0(%arg0: i32) -> (i32, i32) {
    %c0_i32 = arith.constant 0 : i32
    %c0_i32_0 = arith.constant 0 : i32
    return %arg0, %c0_i32 : i32, i32
  }
  func.func @transform_1(%arg0: i32) -> (i32, i32) {
    %c0_i32 = arith.constant 0 : i32
    %c0_i32_0 = arith.constant 0 : i32
    %c0_i32_1 = arith.constant 0 : i32
    return %c0_i32, %c0_i32_0 : i32, i32
  }
  func.func @transform_2(%arg0: i32) -> (i32, i32) {
    %c0_i32 = arith.constant 0 : i32
    %c0_i32_0 = arith.constant 0 : i32
    %c0_i32_1 = arith.constant 0 : i32
    return %c0_i32, %c0_i32_0 : i32, i32
  }
  func.func @transform_3(%arg0: i32) -> (i32, i32) {
    %c0_i32 = arith.constant 0 : i32
    %c0_i32_0 = arith.constant 0 : i32
    return %arg0, %c0_i32 : i32, i32
  }
}

module attributes {stable_mosaic.version = 11 : i64} {
  func.func @attn_dual_kernel(%arg0: i32, %arg1: memref<1x4x32xf32, #tpu.memory_space<vmem>>, %arg2: memref<1x8x96xf32, #tpu.memory_space<vmem>>, %arg3: memref<1x1x8xf32, #tpu.memory_space<vmem>>, %arg4: memref<1x4x32xf32, #tpu.memory_space<vmem>>, %arg5: memref<1x8x32xf32, #tpu.memory_space<vmem>>) attributes {dimension_semantics = [#tpu.dimension_semantics<parallel>], iteration_bounds = array<i64: 2>, scalar_prefetch = 0 : i64, scratch_operands = 0 : i64, tpu.core_type = #tpu.core_type<tc>, window_params = [{transform_indices = @transform_0, window_bounds = array<i64: 1, 4, 32>}, {transform_indices = @transform_1, window_bounds = array<i64: 1, 8, 96>}, {transform_indices = @transform_2, window_bounds = array<i64: 1, 1, 8>}, {transform_indices = @transform_3, window_bounds = array<i64: 1, 4, 32>}, {transform_indices = @transform_4, window_bounds = array<i64: 1, 8, 32>}]} {
    %c0 = arith.constant 0 : index
    %c0_0 = arith.constant 0 : index
    %c0_1 = arith.constant 0 : index
    %0 = vector.load %arg2[%c0, %c0_0, %c0_1] : memref<1x8x96xf32, #tpu.memory_space<vmem>>, vector<1x8x96xf32>
    %1 = vector.shape_cast %0 : vector<1x8x96xf32> to vector<8x96xf32>
    %2 = vector.extract_strided_slice %1 {offsets = [0, 0], sizes = [8, 32], strides = [1, 1]} : vector<8x96xf32> to vector<8x32xf32>
    %3 = vector.extract_strided_slice %1 {offsets = [0, 32], sizes = [8, 32], strides = [1, 1]} : vector<8x96xf32> to vector<8x32xf32>
    %4 = vector.extract_strided_slice %1 {offsets = [0, 64], sizes = [8, 32], strides = [1, 1]} : vector<8x96xf32> to vector<8x32xf32>
    %c0_2 = arith.constant 0 : index
    %c0_3 = arith.constant 0 : index
    %c0_4 = arith.constant 0 : index
    %5 = vector.load %arg3[%c0_2, %c0_3, %c0_4] : memref<1x1x8xf32, #tpu.memory_space<vmem>>, vector<1x1x8xf32>
    %6 = vector.shape_cast %5 : vector<1x1x8xf32> to vector<1x8xf32>
    %c0_5 = arith.constant 0 : index
    %c0_6 = arith.constant 0 : index
    %c0_7 = arith.constant 0 : index
    %7 = vector.load %arg1[%c0_5, %c0_6, %c0_7] : memref<1x4x32xf32, #tpu.memory_space<vmem>>, vector<1x4x32xf32>
    %8 = vector.shape_cast %7 : vector<1x4x32xf32> to vector<4x32xf32>
    %9 = vector.extract_strided_slice %8 {offsets = [0, 0], sizes = [4, 8], strides = [1, 1]} : vector<4x32xf32> to vector<4x8xf32>
    %10 = vector.extract_strided_slice %2 {offsets = [0, 0], sizes = [8, 8], strides = [1, 1]} : vector<8x32xf32> to vector<8x8xf32>
    %11 = vector.extract_strided_slice %3 {offsets = [0, 0], sizes = [8, 8], strides = [1, 1]} : vector<8x32xf32> to vector<8x8xf32>
    %cst = arith.constant dense<0.000000e+00> : vector<4x8xf32>
    %12 = tpu.matmul %9, %10, %cst {dimension_numbers = #tpu.dot_dimension_numbers<[1], [1], [0], [0], [0, 0, 1, 0], [], []>} : vector<4x8xf32>, vector<8x8xf32>, vector<4x8xf32> -> vector<4x8xf32>
    %13 = vector.broadcast %6 : vector<1x8xf32> to vector<4x8xf32>
    %14 = arith.addf %12, %13 : vector<4x8xf32>
    %cst_8 = arith.constant dense<0xFF800000> : vector<4xf32>
    %15 = vector.multi_reduction <maximumf>, %14, %cst_8 [1] : vector<4x8xf32> to vector<4xf32>
    %16 = vector.shape_cast %15 : vector<4xf32> to vector<4x1xf32>
    %17 = vector.broadcast %16 : vector<4x1xf32> to vector<4x8xf32>
    %18 = arith.subf %14, %17 : vector<4x8xf32>
    %19 = math.exp %18 : vector<4x8xf32>
    %cst_9 = arith.constant dense<0.000000e+00> : vector<4xf32>
    %20 = vector.multi_reduction <add>, %19, %cst_9 [1] : vector<4x8xf32> to vector<4xf32>
    %21 = vector.shape_cast %20 : vector<4xf32> to vector<4x1xf32>
    %22 = tpu.reciprocal %21 {approx = true} : vector<4x1xf32> -> vector<4x1xf32>
    %23 = vector.broadcast %22 : vector<4x1xf32> to vector<4x8xf32>
    %24 = arith.mulf %19, %23 : vector<4x8xf32>
    %cst_10 = arith.constant dense<0.000000e+00> : vector<4x8xf32>
    %25 = tpu.matmul %24, %11, %cst_10 {dimension_numbers = #tpu.dot_dimension_numbers<[1], [0], [0], [1], [0, 0, 1, 1], [], []>} : vector<4x8xf32>, vector<8x8xf32>, vector<4x8xf32> -> vector<4x8xf32>
    %26 = vector.extract_strided_slice %8 {offsets = [0, 8], sizes = [4, 8], strides = [1, 1]} : vector<4x32xf32> to vector<4x8xf32>
    %27 = vector.extract_strided_slice %2 {offsets = [0, 8], sizes = [8, 8], strides = [1, 1]} : vector<8x32xf32> to vector<8x8xf32>
    %28 = vector.extract_strided_slice %3 {offsets = [0, 8], sizes = [8, 8], strides = [1, 1]} : vector<8x32xf32> to vector<8x8xf32>
    %cst_11 = arith.constant dense<0.000000e+00> : vector<4x8xf32>
    %29 = tpu.matmul %26, %27, %cst_11 {dimension_numbers = #tpu.dot_dimension_numbers<[1], [1], [0], [0], [0, 0, 1, 0], [], []>} : vector<4x8xf32>, vector<8x8xf32>, vector<4x8xf32> -> vector<4x8xf32>
    %30 = vector.broadcast %6 : vector<1x8xf32> to vector<4x8xf32>
    %31 = arith.addf %29, %30 : vector<4x8xf32>
    %cst_12 = arith.constant dense<0xFF800000> : vector<4xf32>
    %32 = vector.multi_reduction <maximumf>, %31, %cst_12 [1] : vector<4x8xf32> to vector<4xf32>
    %33 = vector.shape_cast %32 : vector<4xf32> to vector<4x1xf32>
    %34 = vector.broadcast %33 : vector<4x1xf32> to vector<4x8xf32>
    %35 = arith.subf %31, %34 : vector<4x8xf32>
    %36 = math.exp %35 : vector<4x8xf32>
    %cst_13 = arith.constant dense<0.000000e+00> : vector<4xf32>
    %37 = vector.multi_reduction <add>, %36, %cst_13 [1] : vector<4x8xf32> to vector<4xf32>
    %38 = vector.shape_cast %37 : vector<4xf32> to vector<4x1xf32>
    %39 = tpu.reciprocal %38 {approx = true} : vector<4x1xf32> -> vector<4x1xf32>
    %40 = vector.broadcast %39 : vector<4x1xf32> to vector<4x8xf32>
    %41 = arith.mulf %36, %40 : vector<4x8xf32>
    %cst_14 = arith.constant dense<0.000000e+00> : vector<4x8xf32>
    %42 = tpu.matmul %41, %28, %cst_14 {dimension_numbers = #tpu.dot_dimension_numbers<[1], [0], [0], [1], [0, 0, 1, 1], [], []>} : vector<4x8xf32>, vector<8x8xf32>, vector<4x8xf32> -> vector<4x8xf32>
    %43 = vector.extract_strided_slice %8 {offsets = [0, 16], sizes = [4, 8], strides = [1, 1]} : vector<4x32xf32> to vector<4x8xf32>
    %44 = vector.extract_strided_slice %2 {offsets = [0, 16], sizes = [8, 8], strides = [1, 1]} : vector<8x32xf32> to vector<8x8xf32>
    %45 = vector.extract_strided_slice %3 {offsets = [0, 16], sizes = [8, 8], strides = [1, 1]} : vector<8x32xf32> to vector<8x8xf32>
    %cst_15 = arith.constant dense<0.000000e+00> : vector<4x8xf32>
    %46 = tpu.matmul %43, %44, %cst_15 {dimension_numbers = #tpu.dot_dimension_numbers<[1], [1], [0], [0], [0, 0, 1, 0], [], []>} : vector<4x8xf32>, vector<8x8xf32>, vector<4x8xf32> -> vector<4x8xf32>
    %47 = vector.broadcast %6 : vector<1x8xf32> to vector<4x8xf32>
    %48 = arith.addf %46, %47 : vector<4x8xf32>
    %cst_16 = arith.constant dense<0xFF800000> : vector<4xf32>
    %49 = vector.multi_reduction <maximumf>, %48, %cst_16 [1] : vector<4x8xf32> to vector<4xf32>
    %50 = vector.shape_cast %49 : vector<4xf32> to vector<4x1xf32>
    %51 = vector.broadcast %50 : vector<4x1xf32> to vector<4x8xf32>
    %52 = arith.subf %48, %51 : vector<4x8xf32>
    %53 = math.exp %52 : vector<4x8xf32>
    %cst_17 = arith.constant dense<0.000000e+00> : vector<4xf32>
    %54 = vector.multi_reduction <add>, %53, %cst_17 [1] : vector<4x8xf32> to vector<4xf32>
    %55 = vector.shape_cast %54 : vector<4xf32> to vector<4x1xf32>
    %56 = tpu.reciprocal %55 {approx = true} : vector<4x1xf32> -> vector<4x1xf32>
    %57 = vector.broadcast %56 : vector<4x1xf32> to vector<4x8xf32>
    %58 = arith.mulf %53, %57 : vector<4x8xf32>
    %cst_18 = arith.constant dense<0.000000e+00> : vector<4x8xf32>
    %59 = tpu.matmul %58, %45, %cst_18 {dimension_numbers = #tpu.dot_dimension_numbers<[1], [0], [0], [1], [0, 0, 1, 1], [], []>} : vector<4x8xf32>, vector<8x8xf32>, vector<4x8xf32> -> vector<4x8xf32>
    %60 = vector.extract_strided_slice %8 {offsets = [0, 24], sizes = [4, 8], strides = [1, 1]} : vector<4x32xf32> to vector<4x8xf32>
    %61 = vector.extract_strided_slice %2 {offsets = [0, 24], sizes = [8, 8], strides = [1, 1]} : vector<8x32xf32> to vector<8x8xf32>
    %62 = vector.extract_strided_slice %3 {offsets = [0, 24], sizes = [8, 8], strides = [1, 1]} : vector<8x32xf32> to vector<8x8xf32>
    %cst_19 = arith.constant dense<0.000000e+00> : vector<4x8xf32>
    %63 = tpu.matmul %60, %61, %cst_19 {dimension_numbers = #tpu.dot_dimension_numbers<[1], [1], [0], [0], [0, 0, 1, 0], [], []>} : vector<4x8xf32>, vector<8x8xf32>, vector<4x8xf32> -> vector<4x8xf32>
    %64 = vector.broadcast %6 : vector<1x8xf32> to vector<4x8xf32>
    %65 = arith.addf %63, %64 : vector<4x8xf32>
    %cst_20 = arith.constant dense<0xFF800000> : vector<4xf32>
    %66 = vector.multi_reduction <maximumf>, %65, %cst_20 [1] : vector<4x8xf32> to vector<4xf32>
    %67 = vector.shape_cast %66 : vector<4xf32> to vector<4x1xf32>
    %68 = vector.broadcast %67 : vector<4x1xf32> to vector<4x8xf32>
    %69 = arith.subf %65, %68 : vector<4x8xf32>
    %70 = math.exp %69 : vector<4x8xf32>
    %cst_21 = arith.constant dense<0.000000e+00> : vector<4xf32>
    %71 = vector.multi_reduction <add>, %70, %cst_21 [1] : vector<4x8xf32> to vector<4xf32>
    %72 = vector.shape_cast %71 : vector<4xf32> to vector<4x1xf32>
    %73 = tpu.reciprocal %72 {approx = true} : vector<4x1xf32> -> vector<4x1xf32>
    %74 = vector.broadcast %73 : vector<4x1xf32> to vector<4x8xf32>
    %75 = arith.mulf %70, %74 : vector<4x8xf32>
    %cst_22 = arith.constant dense<0.000000e+00> : vector<4x8xf32>
    %76 = tpu.matmul %75, %62, %cst_22 {dimension_numbers = #tpu.dot_dimension_numbers<[1], [0], [0], [1], [0, 0, 1, 1], [], []>} : vector<4x8xf32>, vector<8x8xf32>, vector<4x8xf32> -> vector<4x8xf32>
    %77 = tpu.concatenate %25, %42, %59, %76 in 1 : vector<4x8xf32>, vector<4x8xf32>, vector<4x8xf32>, vector<4x8xf32> -> vector<4x32xf32>
    %c0_23 = arith.constant 0 : index
    %c0_24 = arith.constant 0 : index
    %c0_25 = arith.constant 0 : index
    %78 = vector.load %arg4[%c0_23, %c0_24, %c0_25] : memref<1x4x32xf32, #tpu.memory_space<vmem>>, vector<1x4x32xf32>
    %79 = vector.shape_cast %78 : vector<1x4x32xf32> to vector<4x32xf32>
    %80 = vector.shape_cast %77 : vector<4x32xf32> to vector<1x4x32xf32>
    tpu.vector_store %arg4[%c0_23, %c0_24, %c0_25], %80 {strides = array<i32>} : memref<1x4x32xf32, #tpu.memory_space<vmem>>, vector<1x4x32xf32>,
    %81 = vector.extract_strided_slice %4 {offsets = [0, 0], sizes = [8, 8], strides = [1, 1]} : vector<8x32xf32> to vector<8x8xf32>
    %82 = vector.extract_strided_slice %2 {offsets = [0, 0], sizes = [8, 8], strides = [1, 1]} : vector<8x32xf32> to vector<8x8xf32>
    %83 = vector.extract_strided_slice %3 {offsets = [0, 0], sizes = [8, 8], strides = [1, 1]} : vector<8x32xf32> to vector<8x8xf32>
    %cst_26 = arith.constant dense<0.000000e+00> : vector<8x8xf32>
    %84 = tpu.matmul %81, %82, %cst_26 {dimension_numbers = #tpu.dot_dimension_numbers<[1], [1], [0], [0], [0, 0, 1, 0], [], []>} : vector<8x8xf32>, vector<8x8xf32>, vector<8x8xf32> -> vector<8x8xf32>
    %85 = vector.broadcast %6 : vector<1x8xf32> to vector<8x8xf32>
    %86 = arith.addf %84, %85 : vector<8x8xf32>
    %cst_27 = arith.constant dense<0xFF800000> : vector<8xf32>
    %87 = vector.multi_reduction <maximumf>, %86, %cst_27 [1] : vector<8x8xf32> to vector<8xf32>
    %88 = vector.shape_cast %87 : vector<8xf32> to vector<8x1xf32>
    %89 = vector.broadcast %88 : vector<8x1xf32> to vector<8x8xf32>
    %90 = arith.subf %86, %89 : vector<8x8xf32>
    %91 = math.exp %90 : vector<8x8xf32>
    %cst_28 = arith.constant dense<0.000000e+00> : vector<8xf32>
    %92 = vector.multi_reduction <add>, %91, %cst_28 [1] : vector<8x8xf32> to vector<8xf32>
    %93 = vector.shape_cast %92 : vector<8xf32> to vector<8x1xf32>
    %94 = tpu.reciprocal %93 {approx = true} : vector<8x1xf32> -> vector<8x1xf32>
    %95 = vector.broadcast %94 : vector<8x1xf32> to vector<8x8xf32>
    %96 = arith.mulf %91, %95 : vector<8x8xf32>
    %cst_29 = arith.constant dense<0.000000e+00> : vector<8x8xf32>
    %97 = tpu.matmul %96, %83, %cst_29 {dimension_numbers = #tpu.dot_dimension_numbers<[1], [0], [0], [1], [0, 0, 1, 1], [], []>} : vector<8x8xf32>, vector<8x8xf32>, vector<8x8xf32> -> vector<8x8xf32>
    %98 = vector.extract_strided_slice %4 {offsets = [0, 8], sizes = [8, 8], strides = [1, 1]} : vector<8x32xf32> to vector<8x8xf32>
    %99 = vector.extract_strided_slice %2 {offsets = [0, 8], sizes = [8, 8], strides = [1, 1]} : vector<8x32xf32> to vector<8x8xf32>
    %100 = vector.extract_strided_slice %3 {offsets = [0, 8], sizes = [8, 8], strides = [1, 1]} : vector<8x32xf32> to vector<8x8xf32>
    %cst_30 = arith.constant dense<0.000000e+00> : vector<8x8xf32>
    %101 = tpu.matmul %98, %99, %cst_30 {dimension_numbers = #tpu.dot_dimension_numbers<[1], [1], [0], [0], [0, 0, 1, 0], [], []>} : vector<8x8xf32>, vector<8x8xf32>, vector<8x8xf32> -> vector<8x8xf32>
    %102 = vector.broadcast %6 : vector<1x8xf32> to vector<8x8xf32>
    %103 = arith.addf %101, %102 : vector<8x8xf32>
    %cst_31 = arith.constant dense<0xFF800000> : vector<8xf32>
    %104 = vector.multi_reduction <maximumf>, %103, %cst_31 [1] : vector<8x8xf32> to vector<8xf32>
    %105 = vector.shape_cast %104 : vector<8xf32> to vector<8x1xf32>
    %106 = vector.broadcast %105 : vector<8x1xf32> to vector<8x8xf32>
    %107 = arith.subf %103, %106 : vector<8x8xf32>
    %108 = math.exp %107 : vector<8x8xf32>
    %cst_32 = arith.constant dense<0.000000e+00> : vector<8xf32>
    %109 = vector.multi_reduction <add>, %108, %cst_32 [1] : vector<8x8xf32> to vector<8xf32>
    %110 = vector.shape_cast %109 : vector<8xf32> to vector<8x1xf32>
    %111 = tpu.reciprocal %110 {approx = true} : vector<8x1xf32> -> vector<8x1xf32>
    %112 = vector.broadcast %111 : vector<8x1xf32> to vector<8x8xf32>
    %113 = arith.mulf %108, %112 : vector<8x8xf32>
    %cst_33 = arith.constant dense<0.000000e+00> : vector<8x8xf32>
    %114 = tpu.matmul %113, %100, %cst_33 {dimension_numbers = #tpu.dot_dimension_numbers<[1], [0], [0], [1], [0, 0, 1, 1], [], []>} : vector<8x8xf32>, vector<8x8xf32>, vector<8x8xf32> -> vector<8x8xf32>
    %115 = vector.extract_strided_slice %4 {offsets = [0, 16], sizes = [8, 8], strides = [1, 1]} : vector<8x32xf32> to vector<8x8xf32>
    %116 = vector.extract_strided_slice %2 {offsets = [0, 16], sizes = [8, 8], strides = [1, 1]} : vector<8x32xf32> to vector<8x8xf32>
    %117 = vector.extract_strided_slice %3 {offsets = [0, 16], sizes = [8, 8], strides = [1, 1]} : vector<8x32xf32> to vector<8x8xf32>
    %cst_34 = arith.constant dense<0.000000e+00> : vector<8x8xf32>
    %118 = tpu.matmul %115, %116, %cst_34 {dimension_numbers = #tpu.dot_dimension_numbers<[1], [1], [0], [0], [0, 0, 1, 0], [], []>} : vector<8x8xf32>, vector<8x8xf32>, vector<8x8xf32> -> vector<8x8xf32>
    %119 = vector.broadcast %6 : vector<1x8xf32> to vector<8x8xf32>
    %120 = arith.addf %118, %119 : vector<8x8xf32>
    %cst_35 = arith.constant dense<0xFF800000> : vector<8xf32>
    %121 = vector.multi_reduction <maximumf>, %120, %cst_35 [1] : vector<8x8xf32> to vector<8xf32>
    %122 = vector.shape_cast %121 : vector<8xf32> to vector<8x1xf32>
    %123 = vector.broadcast %122 : vector<8x1xf32> to vector<8x8xf32>
    %124 = arith.subf %120, %123 : vector<8x8xf32>
    %125 = math.exp %124 : vector<8x8xf32>
    %cst_36 = arith.constant dense<0.000000e+00> : vector<8xf32>
    %126 = vector.multi_reduction <add>, %125, %cst_36 [1] : vector<8x8xf32> to vector<8xf32>
    %127 = vector.shape_cast %126 : vector<8xf32> to vector<8x1xf32>
    %128 = tpu.reciprocal %127 {approx = true} : vector<8x1xf32> -> vector<8x1xf32>
    %129 = vector.broadcast %128 : vector<8x1xf32> to vector<8x8xf32>
    %130 = arith.mulf %125, %129 : vector<8x8xf32>
    %cst_37 = arith.constant dense<0.000000e+00> : vector<8x8xf32>
    %131 = tpu.matmul %130, %117, %cst_37 {dimension_numbers = #tpu.dot_dimension_numbers<[1], [0], [0], [1], [0, 0, 1, 1], [], []>} : vector<8x8xf32>, vector<8x8xf32>, vector<8x8xf32> -> vector<8x8xf32>
    %132 = vector.extract_strided_slice %4 {offsets = [0, 24], sizes = [8, 8], strides = [1, 1]} : vector<8x32xf32> to vector<8x8xf32>
    %133 = vector.extract_strided_slice %2 {offsets = [0, 24], sizes = [8, 8], strides = [1, 1]} : vector<8x32xf32> to vector<8x8xf32>
    %134 = vector.extract_strided_slice %3 {offsets = [0, 24], sizes = [8, 8], strides = [1, 1]} : vector<8x32xf32> to vector<8x8xf32>
    %cst_38 = arith.constant dense<0.000000e+00> : vector<8x8xf32>
    %135 = tpu.matmul %132, %133, %cst_38 {dimension_numbers = #tpu.dot_dimension_numbers<[1], [1], [0], [0], [0, 0, 1, 0], [], []>} : vector<8x8xf32>, vector<8x8xf32>, vector<8x8xf32> -> vector<8x8xf32>
    %136 = vector.broadcast %6 : vector<1x8xf32> to vector<8x8xf32>
    %137 = arith.addf %135, %136 : vector<8x8xf32>
    %cst_39 = arith.constant dense<0xFF800000> : vector<8xf32>
    %138 = vector.multi_reduction <maximumf>, %137, %cst_39 [1] : vector<8x8xf32> to vector<8xf32>
    %139 = vector.shape_cast %138 : vector<8xf32> to vector<8x1xf32>
    %140 = vector.broadcast %139 : vector<8x1xf32> to vector<8x8xf32>
    %141 = arith.subf %137, %140 : vector<8x8xf32>
    %142 = math.exp %141 : vector<8x8xf32>
    %cst_40 = arith.constant dense<0.000000e+00> : vector<8xf32>
    %143 = vector.multi_reduction <add>, %142, %cst_40 [1] : vector<8x8xf32> to vector<8xf32>
    %144 = vector.shape_cast %143 : vector<8xf32> to vector<8x1xf32>
    %145 = tpu.reciprocal %144 {approx = true} : vector<8x1xf32> -> vector<8x1xf32>
    %146 = vector.broadcast %145 : vector<8x1xf32> to vector<8x8xf32>
    %147 = arith.mulf %142, %146 : vector<8x8xf32>
    %cst_41 = arith.constant dense<0.000000e+00> : vector<8x8xf32>
    %148 = tpu.matmul %147, %134, %cst_41 {dimension_numbers = #tpu.dot_dimension_numbers<[1], [0], [0], [1], [0, 0, 1, 1], [], []>} : vector<8x8xf32>, vector<8x8xf32>, vector<8x8xf32> -> vector<8x8xf32>
    %149 = tpu.concatenate %97, %114, %131, %148 in 1 : vector<8x8xf32>, vector<8x8xf32>, vector<8x8xf32>, vector<8x8xf32> -> vector<8x32xf32>
    %c0_42 = arith.constant 0 : index
    %c0_43 = arith.constant 0 : index
    %c0_44 = arith.constant 0 : index
    %150 = vector.load %arg5[%c0_42, %c0_43, %c0_44] : memref<1x8x32xf32, #tpu.memory_space<vmem>>, vector<1x8x32xf32>
    %151 = vector.shape_cast %150 : vector<1x8x32xf32> to vector<8x32xf32>
    %152 = vector.shape_cast %149 : vector<8x32xf32> to vector<1x8x32xf32>
    tpu.vector_store %arg5[%c0_42, %c0_43, %c0_44], %152 {strides = array<i32>} : memref<1x8x32xf32, #tpu.memory_space<vmem>>, vector<1x8x32xf32>,
    return
  }
  func.func @transform_0(%arg0: i32) -> (i32, i32, i32) {
    %c0_i32 = arith.constant 0 : i32
    %c0_i32_0 = arith.constant 0 : i32
    %c0_i32_1 = arith.constant 0 : i32
    return %arg0, %c0_i32, %c0_i32_0 : i32, i32, i32
  }
  func.func @transform_1(%arg0: i32) -> (i32, i32, i32) {
    %c0_i32 = arith.constant 0 : i32
    %c0_i32_0 = arith.constant 0 : i32
    %c0_i32_1 = arith.constant 0 : i32
    return %arg0, %c0_i32, %c0_i32_0 : i32, i32, i32
  }
  func.func @transform_2(%arg0: i32) -> (i32, i32, i32) {
    %c0_i32 = arith.constant 0 : i32
    %c0_i32_0 = arith.constant 0 : i32
    %c0_i32_1 = arith.constant 0 : i32
    return %arg0, %c0_i32, %c0_i32_0 : i32, i32, i32
  }
  func.func @transform_3(%arg0: i32) -> (i32, i32, i32) {
    %c0_i32 = arith.constant 0 : i32
    %c0_i32_0 = arith.constant 0 : i32
    %c0_i32_1 = arith.constant 0 : i32
    return %arg0, %c0_i32, %c0_i32_0 : i32, i32, i32
  }
  func.func @transform_4(%arg0: i32) -> (i32, i32, i32) {
    %c0_i32 = arith.constant 0 : i32
    %c0_i32_0 = arith.constant 0 : i32
    %c0_i32_1 = arith.constant 0 : i32
    return %arg0, %c0_i32, %c0_i32_0 : i32, i32, i32
  }
}

</mosaic_0001>

<llo_original>
// kernel: m2dpr_cross_attention.4
$region0: #{m2dpr_cross_attention.4}
  #allocation0 [shape = 'u32[]', space=smem, size = 0x4, offset = 0x4, fixed_abs, tag = 'smem constant byte address 0x4 - core index']
  #allocation1 [shape = 'u32[72,128]{1,0:T(1,128)}', space=vmem, size = 0x9000, scoped, tag = 'internal scratch']
  %s0 = inlined_call_operand.vmem [shape: f32[8,32], index: 0, kind: input, shape index: {}]
  %s1 = inlined_call_operand.vmem [shape: f32[32,32], index: 1, kind: input, shape index: {}]
  %s2 = inlined_call_operand.vmem [shape: f32[1,32], index: 2, kind: input, shape index: {}]
  %s3 = inlined_call_operand.vmem [shape: f32[8,32], index: 3, kind: output, shape index: {}]
  %s4 = sld [smem:[#allocation0]]
  $region22: #{m2dpr_cross_attention.4} parent=0
    _
  %s6 = ssub.s32 1, %s4
  %s7 = scalar_select 0, %s6, %s4
  // Predicated region
  $region2: #{m2dpr_cross_attention.4} parent=0 // pred_check
    _
  $region3: #{m2dpr_cross_attention.4} parent=0 // pred_check_branch
    %9 = sbr.rel (0) target = $region5
  $region4: #{m2dpr_cross_attention.4} parent=0 // pred_region
    _
  $region5: #{m2dpr_cross_attention.4} parent=0 // pred_fallthru
    _
  // Predicated region
  $region6: #{m2dpr_cross_attention.4} parent=0 // pred_check
    _
  $region7: #{m2dpr_cross_attention.4} parent=0 // pred_check_branch
    %11 = sbr.rel (0) target = $region9
  $region8: #{m2dpr_cross_attention.4} parent=0 // pred_region
    _
  $region9: #{m2dpr_cross_attention.4} parent=0 // pred_fallthru
    _
  // Predicated region
  $region10: #{m2dpr_cross_attention.4} parent=0 // pred_check
    _
  $region11: #{m2dpr_cross_attention.4} parent=0 // pred_check_branch
    %13 = sbr.rel (0) target = $region13
  $region12: #{m2dpr_cross_attention.4} parent=0 // pred_region
    _
  $region13: #{m2dpr_cross_attention.4} parent=0 // pred_fallthru
    _
  %v14 = vld [vmem:[%s0] sm:$0xff]
  %v15 = vld [vmem:[%s1] sm:$0xff]
  %v16 = vld [vmem:[%s1 + $0x8] sm:$0xff]
  %v17 = vld [vmem:[%s1 + $0x10] sm:$0xff]
  %v18 = vld [vmem:[%s1 + $0x18] sm:$0xff]
  %v19 = vld [vmem:[%s2] sm:$0x1]
  %v21 = vperm.slane %v19, 0
  %vm23 = vcmask 261120
  %v25 = vsel %vm23, %v14, 0
  %v28 = vsel %vm23, %v15, 0
  %v31 = vsel %vm23, %v16, 0
  %v34 = vsel %vm23, %v17, 0
  %v37 = vsel %vm23, %v18, 0
  %39 = vmatpush.xpose.msra.mxu0 0.0
  %40 = vmatpush.xpose.msra.mxu0 0.0
  %41 = vmatpush.xpose.msra.mxu0 0.0
  %42 = vmatpush.xpose.msra.mxu0 0.0
  %43 = vmatpush.xpose.msra.mxu0 0.0
  %44 = vmatpush.xpose.msra.mxu0 0.0
  %45 = vmatpush.xpose.msra.mxu0 0.0
  %46 = vmatpush.xpose.msra.mxu0 0.0
  %47 = vmatpush.xpose.msra.mxu0 0.0
  %48 = vmatpush.xpose.msra.mxu0 0.0
  %49 = vmatpush.xpose.msra.mxu0 0.0
  %50 = vmatpush.xpose.msra.mxu0 0.0
  %51 = vmatpush.xpose.msra.mxu0 %v37
  %52 = vmatpush.xpose.msra.mxu0 %v34
  %53 = vmatpush.xpose.msra.mxu0 %v31
  %54 = vmatpush.xpose.msra.mxu0 %v28
  %55 = vmatmul.f32.gmra.mxu0 %v25
  %v56 = vpop.f32.mrf.mxu0
  %v57 = vadd.f32 %v21, %v56
  %58 = vdwg.mxu0
  %59 = vst.msk [vmem:[%s3] sm:$0xff] %vm23, %v57
  // Predicated region
  $region14: #{m2dpr_cross_attention.4} parent=0 // pred_check
    _
  $region15: #{m2dpr_cross_attention.4} parent=0 // pred_check_branch
    %61 = sbr.rel (0) target = $region17
  $region16: #{m2dpr_cross_attention.4} parent=0 // pred_region
    _
  $region17: #{m2dpr_cross_attention.4} parent=0 // pred_fallthru
    _
  // Predicated region
  $region18: #{m2dpr_cross_attention.4} parent=0 // pred_check
    _
  $region19: #{m2dpr_cross_attention.4} parent=0 // pred_check_branch
    %63 = sbr.rel (0) target = $region21
  $region20: #{m2dpr_cross_attention.4} parent=0 // pred_region
    _
  $region21: #{m2dpr_cross_attention.4} parent=0 // pred_fallthru
    _

// kernel: m2dpr_cross_attention.3
$region0: #{m2dpr_cross_attention.3}
  #allocation0 [shape = 'u32[]', space=smem, size = 0x4, offset = 0x4, fixed_abs, tag = 'smem constant byte address 0x4 - core index']
  #allocation1 [shape = 'u32[72,128]{1,0:T(1,128)}', space=vmem, size = 0x9000, scoped, tag = 'internal scratch']
  %s0 = inlined_call_operand.vmem [shape: f32[16,32], index: 0, kind: input, shape index: {}]
  %s1 = inlined_call_operand.vmem [shape: f32[96,32], index: 1, kind: input, shape index: {}]
  %s2 = inlined_call_operand.vmem [shape: f32[1,96], index: 2, kind: input, shape index: {}]
  %s3 = inlined_call_operand.vmem [shape: f32[16,96], index: 3, kind: output, shape index: {}]
  %s4 = sld [smem:[#allocation0]]
  $region22: #{m2dpr_cross_attention.3} parent=0
    _
  %s6 = ssub.s32 1, %s4
  %s7 = scalar_select 0, %s6, %s4
  // Predicated region
  $region2: #{m2dpr_cross_attention.3} parent=0 // pred_check
    _
  $region3: #{m2dpr_cross_attention.3} parent=0 // pred_check_branch
    %9 = sbr.rel (0) target = $region5
  $region4: #{m2dpr_cross_attention.3} parent=0 // pred_region
    _
  $region5: #{m2dpr_cross_attention.3} parent=0 // pred_fallthru
    _
  // Predicated region
  $region6: #{m2dpr_cross_attention.3} parent=0 // pred_check
    _
  $region7: #{m2dpr_cross_attention.3} parent=0 // pred_check_branch
    %11 = sbr.rel (0) target = $region9
  $region8: #{m2dpr_cross_attention.3} parent=0 // pred_region
    _
  $region9: #{m2dpr_cross_attention.3} parent=0 // pred_fallthru
    _
  // Predicated region
  $region10: #{m2dpr_cross_attention.3} parent=0 // pred_check
    _
  $region11: #{m2dpr_cross_attention.3} parent=0 // pred_check_branch
    %13 = sbr.rel (0) target = $region13
  $region12: #{m2dpr_cross_attention.3} parent=0 // pred_region
    _
  $region13: #{m2dpr_cross_attention.3} parent=0 // pred_fallthru
    _
  %v14 = vld [vmem:[%s0] sm:$0xff]
  %v15 = vld [vmem:[%s0 + $0x8] sm:$0xff]
  %v16 = vld [vmem:[%s1] sm:$0xff]
  %v17 = vld [vmem:[%s1 + $0x8] sm:$0xff]
  %v18 = vld [vmem:[%s1 + $0x10] sm:$0xff]
  %v19 = vld [vmem:[%s1 + $0x18] sm:$0xff]
  %v20 = vld [vmem:[%s1 + $0x20] sm:$0xff]
  %v21 = vld [vmem:[%s1 + $0x28] sm:$0xff]
  %v22 = vld [vmem:[%s1 + $0x30] sm:$0xff]
  %v23 = vld [vmem:[%s1 + $0x38] sm:$0xff]
  %v24 = vld [vmem:[%s1 + $0x40] sm:$0xff]
  %v25 = vld [vmem:[%s1 + $0x48] sm:$0xff]
  %v26 = vld [vmem:[%s1 + $0x50] sm:$0xff]
  %v27 = vld [vmem:[%s1 + $0x58] sm:$0xff]
  %v28 = vld [vmem:[%s2] sm:$0x1]
  %v30 = vperm.slane %v28, 0
  %vm32 = vcmask 261120
  %v34 = vsel %vm32, %v14, 0
  %v37 = vsel %vm32, %v15, 0
  %v40 = vsel %vm32, %v16, 0
  %v43 = vsel %vm32, %v17, 0
  %v46 = vsel %vm32, %v18, 0
  %v49 = vsel %vm32, %v19, 0
  %v52 = vsel %vm32, %v20, 0
  %v55 = vsel %vm32, %v21, 0
  %v58 = vsel %vm32, %v22, 0
  %v61 = vsel %vm32, %v23, 0
  %v64 = vsel %vm32, %v24, 0
  %v67 = vsel %vm32, %v25, 0
  %v70 = vsel %vm32, %v26, 0
  %v73 = vsel %vm32, %v27, 0
  %75 = vmatpush.xpose.msra.mxu0 0.0
  %76 = vmatpush.xpose.msra.mxu0 0.0
  %77 = vmatpush.xpose.msra.mxu0 0.0
  %78 = vmatpush.xpose.msra.mxu0 0.0
  %79 = vmatpush.xpose.msra.mxu0 %v73
  %80 = vmatpush.xpose.msra.mxu0 %v70
  %81 = vmatpush.xpose.msra.mxu0 %v67
  %82 = vmatpush.xpose.msra.mxu0 %v64
  %83 = vmatpush.xpose.msra.mxu0 %v61
  %84 = vmatpush.xpose.msra.mxu0 %v58
  %85 = vmatpush.xpose.msra.mxu0 %v55
  %86 = vmatpush.xpose.msra.mxu0 %v52
  %87 = vmatpush.xpose.msra.mxu0 %v49
  %88 = vmatpush.xpose.msra.mxu0 %v46
  %89 = vmatpush.xpose.msra.mxu0 %v43
  %90 = vmatpush.xpose.msra.mxu0 %v40
  %91 = vmatmul.f32.gmra.mxu0 %v34
  %v92 = vpop.f32.mrf.mxu0
  %v93 = vadd.f32 %v30, %v92
  %94 = vmatmul.f32.gmra.mxu0 %v37
  %v95 = vpop.f32.mrf.mxu0
  %v96 = vadd.f32 %v30, %v95
  %97 = vdwg.mxu0
  %vm98 = vcmask 785408
  %99 = vst.msk [vmem:[%s3] sm:$0xff] %vm98, %v93
  %100 = vst.msk [vmem:[%s3 + $0x8] sm:$0xff] %vm98, %v96
  // Predicated region
  $region14: #{m2dpr_cross_attention.3} parent=0 // pred_check
    _
  $region15: #{m2dpr_cross_attention.3} parent=0 // pred_check_branch
    %102 = sbr.rel (0) target = $region17
  $region16: #{m2dpr_cross_attention.3} parent=0 // pred_region
    _
  $region17: #{m2dpr_cross_attention.3} parent=0 // pred_fallthru
    _
  // Predicated region
  $region18: #{m2dpr_cross_attention.3} parent=0 // pred_check
    _
  $region19: #{m2dpr_cross_attention.3} parent=0 // pred_check_branch
    %104 = sbr.rel (0) target = $region21
  $region20: #{m2dpr_cross_attention.3} parent=0 // pred_region
    _
  $region21: #{m2dpr_cross_attention.3} parent=0 // pred_fallthru
    _

// kernel: m2dpr_cross_attention.5
$region0: #{m2dpr_cross_attention.5}
  #allocation0 [shape = 'u32[]', space=smem, size = 0x4, offset = 0x4, fixed_abs, tag = 'smem constant byte address 0x4 - core index']
  #allocation1 [shape = 'u32[72,128]{1,0:T(1,128)}', space=vmem, size = 0x9000, scoped, tag = 'internal scratch']
  %s0 = inlined_call_operand.vmem [shape: f32[2,4,32], index: 0, kind: input, shape index: {}]
  %s1 = inlined_call_operand.vmem [shape: f32[2,8,96], index: 1, kind: input, shape index: {}]
  %s2 = inlined_call_operand.vmem [shape: f32[2,1,8], index: 2, kind: input, shape index: {}]
  %s3 = inlined_call_operand.hbm [shape: f32[2,4,32], index: 3, kind: output, shape index: {0}]
  %s4 = inlined_call_operand.hbm [shape: f32[2,8,32], index: 4, kind: output, shape index: {1}]
  %5 = xla_tuple %s3, %s4
  %s6 = sld [smem:[#allocation0]]
  $region53: #{m2dpr_cross_attention.5} parent=0
    _
  %s8 = ssub.s32 1, %s6
  %s9 = scalar_select 0, %s8, %s6
  $region1: #{m2dpr_cross_attention.5} parent=0
    #allocation2 [shape = 'u8[4096]{0}', space=vmem, size = 0x1000, scoped, tag = 'output window, operand 0']
    #allocation3 [shape = 's32[2]{0}', space=sflag, size = 0x8, scoped, tag = 'scoped memory for m2dpr_cross_attention.5']
    #allocation4 [shape = 'u8[8192]{0}', space=vmem, size = 0x2000, scoped, tag = 'output window, operand 1']
    #allocation5 [shape = 's32[2]{0}', space=sflag, size = 0x8, scoped, tag = 'scoped memory for m2dpr_cross_attention.5']
    %10 = vsyncpa [#allocation3], 0
    %s11 = scalar_lea.sflag [#allocation3], 1
    %12 = vsyncpa %s11, 0
    %13 = vsyncpa [#allocation5], 0
    %s14 = scalar_lea.sflag [#allocation5], 1
    %15 = vsyncpa %s14, 0
    loop: start=0, step=1, limit=4
    $region2: #{m2dpr_cross_attention.5} parent=1 // loop_pre_header
      _
    $region3: #{m2dpr_cross_attention.5} parent=1 // loop_header
      %s17 = sphi 0, %s21
      %p18 = scmp.ge.s32.totalorder %s17, 4
      %s27 = sphi 0, %s29
      %s30 = sphi 0, %s27
      %s31 = sphi 0, %s30
      %s47 = sphi 0, %s31
      %s53 = sphi 0, %s55
      %s56 = sphi 0, %s53
      %s57 = sphi 0, %s56
      %s73 = sphi 0, %s57
      %s79 = sphi 0, %s81
      %s82 = sphi 0, %s79
      %s83 = sphi 0, %s82
      %s99 = sphi 0, %s83
      %s105 = sphi 0, %s107
      %s108 = sphi 0, %s105
      %s109 = sphi 0, %s108
      %s125 = sphi 0, %s109
      %s131 = sphi 0, %s133
      %s134 = sphi 0, %s131
      %s135 = sphi 0, %s134
      %s151 = sphi 0, %s135
    $region4: #{m2dpr_cross_attention.5} parent=1 // loop_header_branch
      %20 = sbr.rel (%p18) target = $region8
    $region5: #{m2dpr_cross_attention.5} parent=1 // loop_body
      %s22 = ssub.s32 %s17, 1
      %s23 = ssub.s32 %s17, 2
      %s24 = sadd.s32 %s17, 1
      %s25 = ssub.s32 %s17, %s24
      %p26 = scmp.eq.s32.totalorder %s25, 0
      %s28 = sadd.s32 %s27, 1
      %s29 = scalar_select %p26, %s27, %s28
      %p32 = pneg %p26
      %p33 = scmp.eq.s32.totalorder %s17, 1
      %p34 = por %p32, %p33
      %p35 = scmp.ne.s32.totalorder %s27, %s30
      %p36 = scmp.eq.s32.totalorder %s17, 0
      %p37 = por %p35, %p36
      %p38 = scmp.ne.s32.totalorder %s27, %s30
      %p39 = scmp.eq.s32.totalorder %s22, 1
      %p40 = por %p38, %p39
      %p41 = scmp.ne.s32.totalorder %s30, %s31
      %p42 = scmp.eq.s32.totalorder %s22, 0
      %p43 = por %p41, %p42
      %p44 = scmp.ne.s32.totalorder %s30, %s31
      %p45 = scmp.eq.s32.totalorder %s23, 1
      %p46 = por %p44, %p45
      %p48 = scmp.ne.s32.totalorder %s31, %s47
      %p49 = scmp.eq.s32.totalorder %s23, 0
      %p50 = por %p48, %p49
      %s51 = ssub.s32 %s17, %s24
      %p52 = scmp.eq.s32.totalorder %s51, 0
      %s54 = sadd.s32 %s53, 1
      %s55 = scalar_select %p52, %s53, %s54
      %p58 = pneg %p52
      %p59 = scmp.eq.s32.totalorder %s17, 1
      %p60 = por %p58, %p59
      %p61 = scmp.ne.s32.totalorder %s53, %s56
      %p62 = scmp.eq.s32.totalorder %s17, 0
      %p63 = por %p61, %p62
      %p64 = scmp.ne.s32.totalorder %s53, %s56
      %p65 = scmp.eq.s32.totalorder %s22, 1
      %p66 = por %p64, %p65
      %p67 = scmp.ne.s32.totalorder %s56, %s57
      %p68 = scmp.eq.s32.totalorder %s22, 0
      %p69 = por %p67, %p68
      %p70 = scmp.ne.s32.totalorder %s56, %s57
      %p71 = scmp.eq.s32.totalorder %s23, 1
      %p72 = por %p70, %p71
      %p74 = scmp.ne.s32.totalorder %s57, %s73
      %p75 = scmp.eq.s32.totalorder %s23, 0
      %p76 = por %p74, %p75
      %s77 = ssub.s32 %s17, %s24
      %p78 = scmp.eq.s32.totalorder %s77, 0
      %s80 = sadd.s32 %s79, 1
      %s81 = scalar_select %p78, %s79, %s80
      %p84 = pneg %p78
      %p85 = scmp.eq.s32.totalorder %s17, 1
      %p86 = por %p84, %p85
      %p87 = scmp.ne.s32.totalorder %s79, %s82
      %p88 = scmp.eq.s32.totalorder %s17, 0
      %p89 = por %p87, %p88
      %p90 = scmp.ne.s32.totalorder %s79, %s82
      %p91 = scmp.eq.s32.totalorder %s22, 1
      %p92 = por %p90, %p91
      %p93 = scmp.ne.s32.totalorder %s82, %s83
      %p94 = scmp.eq.s32.totalorder %s22, 0
      %p95 = por %p93, %p94
      %p96 = scmp.ne.s32.totalorder %s82, %s83
      %p97 = scmp.eq.s32.totalorder %s23, 1
      %p98 = por %p96, %p97
      %p100 = scmp.ne.s32.totalorder %s83, %s99
      %p101 = scmp.eq.s32.totalorder %s23, 0
      %p102 = por %p100, %p101
      %s103 = ssub.s32 %s17, %s24
      %p104 = scmp.eq.s32.totalorder %s103, 0
      %s106 = sadd.s32 %s105, 1
      %s107 = scalar_select %p104, %s105, %s106
      %p110 = pneg %p104
      %p111 = scmp.eq.s32.totalorder %s17, 1
      %p112 = por %p110, %p111
      %p113 = scmp.ne.s32.totalorder %s105, %s108
      %p114 = scmp.eq.s32.totalorder %s17, 0
      %p115 = por %p113, %p114
      %p116 = scmp.ne.s32.totalorder %s105, %s108
      %p117 = scmp.eq.s32.totalorder %s22, 1
      %p118 = por %p116, %p117
      %p119 = scmp.ne.s32.totalorder %s108, %s109
      %p120 = scmp.eq.s32.totalorder %s22, 0
      %p121 = por %p119, %p120
      %p122 = scmp.ne.s32.totalorder %s108, %s109
      %p123 = scmp.eq.s32.totalorder %s23, 1
      %p124 = por %p122, %p123
      %p126 = scmp.ne.s32.totalorder %s109, %s125
      %p127 = scmp.eq.s32.totalorder %s23, 0
      %p128 = por %p126, %p127
      %s129 = ssub.s32 %s17, %s24
      %p130 = scmp.eq.s32.totalorder %s129, 0
      %s132 = sadd.s32 %s131, 1
      %s133 = scalar_select %p130, %s131, %s132
      %p136 = pneg %p130
      %p137 = scmp.eq.s32.totalorder %s17, 1
      %p138 = por %p136, %p137
      %p139 = scmp.ne.s32.totalorder %s131, %s134
      %p140 = scmp.eq.s32.totalorder %s17, 0
      %p141 = por %p139, %p140
      %p142 = scmp.ne.s32.totalorder %s131, %s134
      %p143 = scmp.eq.s32.totalorder %s22, 1
      %p144 = por %p142, %p143
      %p145 = scmp.ne.s32.totalorder %s134, %s135
      %p146 = scmp.eq.s32.totalorder %s22, 0
      %p147 = por %p145, %p146
      %p148 = scmp.ne.s32.totalorder %s134, %s135
      %p149 = scmp.eq.s32.totalorder %s23, 1
      %p150 = por %p148, %p149
      %p152 = scmp.ne.s32.totalorder %s135, %s151
      %p153 = scmp.eq.s32.totalorder %s23, 0
      %p154 = por %p152, %p153
      %p155 = scmp.le.s32.totalorder 1, %s17
      %p156 = scmp.lt.s32.totalorder %s17, 3
      %p157 = pnand %p155, %p156
      %p158 = pneg %p157
      // Predicated region
      $region9: #{m2dpr_cross_attention.5} parent=5 // pred_check
        _
      $region10: #{m2dpr_cross_attention.5} parent=5 // pred_check_branch
        %160 = sbr.rel (%p157) target = $region12
      $region11: #{m2dpr_cross_attention.5} parent=5 // pred_region
        %s161 = ssub.s32 %s17, 1
      $region12: #{m2dpr_cross_attention.5} parent=5 // pred_fallthru
        _
      %p162 = scmp.lt.s32.totalorder %s17, 2
      // Predicated region
      $region13: #{m2dpr_cross_attention.5} parent=5 // pred_check
        %p163 = pneg %p162
      $region14: #{m2dpr_cross_attention.5} parent=5 // pred_check_branch
        %165 = sbr.rel (%p163) target = $region16
      $region15: #{m2dpr_cross_attention.5} parent=5 // pred_region
        // Predicated region
        $region17: #{m2dpr_cross_attention.5} parent=15 // pred_check
          %p166 = pneg %p37
        $region18: #{m2dpr_cross_attention.5} parent=15 // pred_check_branch
          %168 = sbr.rel (%p166) target = $region20
        $region19: #{m2dpr_cross_attention.5} parent=15 // pred_region
          %p169 = scmp.lt.s32.totalorder %s17, 1
          %s170 = scalar_select %p169, %s17, 1
          %s171 = smul.addr %s170, 4
          %s172 = scalar_lea.vmem %s0, %s171
        $region20: #{m2dpr_cross_attention.5} parent=15 // pred_fallthru
          _
        // Predicated region
        $region21: #{m2dpr_cross_attention.5} parent=15 // pred_check
          %p173 = pneg %p63
        $region22: #{m2dpr_cross_attention.5} parent=15 // pred_check_branch
          %175 = sbr.rel (%p173) target = $region24
        $region23: #{m2dpr_cross_attention.5} parent=15 // pred_region
          %p176 = scmp.lt.s32.totalorder %s17, 1
          %s177 = scalar_select %p176, %s17, 1
          %s178 = smul.addr %s177, 8
          %s179 = scalar_lea.vmem %s1, %s178
        $region24: #{m2dpr_cross_attention.5} parent=15 // pred_fallthru
          _
        // Predicated region
        $region25: #{m2dpr_cross_attention.5} parent=15 // pred_check
          %p180 = pneg %p89
        $region26: #{m2dpr_cross_attention.5} parent=15 // pred_check_branch
          %182 = sbr.rel (%p180) target = $region28
        $region27: #{m2dpr_cross_attention.5} parent=15 // pred_region
          %p183 = scmp.lt.s32.totalorder %s17, 1
          %s184 = scalar_select %p183, %s17, 1
          %s185 = scalar_lea.vmem %s2, %s184
        $region28: #{m2dpr_cross_attention.5} parent=15 // pred_fallthru
          _
      $region16: #{m2dpr_cross_attention.5} parent=5 // pred_fallthru
        _
      %p186 = scmp.le.s32.totalorder 1, %s17
      %p187 = scmp.lt.s32.totalorder %s17, 3
      %p188 = pnand %p186, %p187
      %p189 = pneg %p188
      // Predicated region
      $region29: #{m2dpr_cross_attention.5} parent=5 // pred_check
        _
      $region30: #{m2dpr_cross_attention.5} parent=5 // pred_check_branch
        %191 = sbr.rel (%p188) target = $region32
      $region31: #{m2dpr_cross_attention.5} parent=5 // pred_region
        %s192 = ssub.s32 %s17, 1
        %p193 = scmp.lt.s32.totalorder %s22, 1
        %s194 = scalar_select %p193, %s22, 1
        %s195 = smul.addr %s194, 4
        %s196 = scalar_lea.vmem %s0, %s195
        %p197 = pneg %p43
        %p198 = pneg %p40
        %p199 = scmp.lt.s32.totalorder %s22, 1
        %s200 = scalar_select %p199, %s22, 1
        %s201 = smul.addr %s200, 8
        %s202 = scalar_lea.vmem %s1, %s201
        %p203 = pneg %p69
        %p204 = pneg %p66
        %p205 = scmp.lt.s32.totalorder %s22, 1
        %s206 = scalar_select %p205, %s22, 1
        %s207 = scalar_lea.vmem %s2, %s206
        %p208 = pneg %p95
        %p209 = pneg %p92
        %p210 = pneg %p121
        %p211 = pneg %p118
        %s212 = sand.u32 %s108, 1
        %s213 = scalar_lea.sflag [#allocation3], %s212
        %s214 = sand.u32 %s108, 1
        %s215 = smul.addr %s214, 4
        %s216 = scalar_lea.vmem [#allocation2], %s215
        %p217 = pneg %p147
        %p218 = pneg %p144
        %s219 = sand.u32 %s134, 1
        %s220 = scalar_lea.sflag [#allocation5], %s219
        %s221 = sand.u32 %s134, 1
        %s222 = smul.addr %s221, 8
        %s223 = scalar_lea.vmem [#allocation4], %s222
        %p224 = scmp.lt.s32.totalorder %s22, 1
        %s225 = scalar_select %p224, %s22, 1
        %s226 = smul.addr %s225, 4
        %s227 = scalar_lea.vmem %s0, %s226
        %p228 = scmp.lt.s32.totalorder %s22, 1
        %s229 = scalar_select %p228, %s22, 1
        %s230 = smul.addr %s229, 8
        %s231 = scalar_lea.vmem %s1, %s230
        %p232 = scmp.lt.s32.totalorder %s22, 1
        %s233 = scalar_select %p232, %s22, 1
        %s234 = scalar_lea.vmem %s2, %s233
        %v235 = vld [vmem:[%s231] sm:$0xff]
        %v236 = vld [vmem:[%s234] sm:$0x1]
        %v237 = vld [vmem:[%s227] sm:$0xf]
        %v239 = vperm.slane %v236, 0
        %vm241 = vcmask 64512
        %v243 = vsel %vm241, %v237, 0
        %v246 = vsel %vm241, %v235, 0
        %248 = vmatpush.xpose.msra.mxu0 0.0
        %249 = vmatpush.xpose.msra.mxu0 0.0
        %250 = vmatpush.xpose.msra.mxu0 0.0
        %251 = vmatpush.xpose.msra.mxu0 0.0
        %252 = vmatpush.xpose.msra.mxu0 0.0
        %253 = vmatpush.xpose.msra.mxu0 0.0
        %254 = vmatpush.xpose.msra.mxu0 0.0
        %255 = vmatpush.xpose.msra.mxu0 0.0
        %256 = vmatpush.xpose.msra.mxu0 0.0
        %257 = vmatpush.xpose.msra.mxu0 0.0
        %258 = vmatpush.xpose.msra.mxu0 0.0
        %259 = vmatpush.xpose.msra.mxu0 0.0
        %260 = vmatpush.xpose.msra.mxu0 0.0
        %261 = vmatpush.xpose.msra.mxu0 0.0
        %262 = vmatpush.xpose.msra.mxu0 0.0
        %263 = vmatpush.xpose.msra.mxu0 %v246
        %264 = vmatmul.f32.gmra.mxu0 %v243
        %v265 = vpop.f32.mrf.mxu0
        %v266 = vadd.f32 %v239, %v265
        %267 = vdwg.mxu0
        %vm268 = vcmask 60416
        %v269 = vsel %vm268, %v266, -inf
        %270 = vmax.xlane.f32.xlu0 %v269
        %v271 = vpop.xlane.xlu0 %270
        %v272 = vsub.f32 %v266, %v271
        %v273 = vmul.f32 %v272, 1.442695
        %v274 = vpow.pop %v273
        %v275 = vsel %vm268, %v274, 0.0
        %276 = vadd.xlane.f32.xlu0 %v275
        %v277 = vpop.xlane.xlu0 %276
        %v278 = vrcp.pop %v277
        %v279 = vmul.f32 %v274, %v278
        %280 = vrot.lane.b32.xlu0 %v235, 96
        %v281 = vpop.permute.xlu0 %280
        %v284 = vsel %vm241, %v279, 0
        %286 = vmatpush.msra.mxu0 0.0
        %287 = vmatpush.msra.mxu0 0.0
        %288 = vmatpush.msra.mxu0 0.0
        %289 = vmatpush.msra.mxu0 0.0
        %290 = vmatpush.msra.mxu0 0.0
        %291 = vmatpush.msra.mxu0 0.0
        %292 = vmatpush.msra.mxu0 0.0
        %293 = vmatpush.msra.mxu0 0.0
        %294 = vmatpush.msra.mxu0 0.0
        %295 = vmatpush.msra.mxu0 0.0
        %296 = vmatpush.msra.mxu0 0.0
        %297 = vmatpush.msra.mxu0 0.0
        %298 = vmatpush.msra.mxu0 0.0
        %299 = vmatpush.msra.mxu0 0.0
        %300 = vmatpush.msra.mxu0 0.0
        %301 = vmatpush.msra.mxu0 %v281
        %302 = vmatmul.f32.gmra.mxu0 %v284
        %v303 = vpop.f32.mrf.mxu0
        %v304 = vadd.f32 0.0, %v303
        %305 = vdwg.mxu0
        %306 = vrot.lane.b32.xlu0 %v237, 120
        %v307 = vpop.permute.xlu0 %306
        %308 = vrot.lane.b32.xlu0 %v235, 120
        %v309 = vpop.permute.xlu0 %308
        %v310 = vsel %vm241, %v307, 0
        %v312 = vsel %vm241, %v309, 0
        %314 = vmatpush.xpose.msra.mxu0 0.0
        %315 = vmatpush.xpose.msra.mxu0 0.0
        %316 = vmatpush.xpose.msra.mxu0 0.0
        %317 = vmatpush.xpose.msra.mxu0 0.0
        %318 = vmatpush.xpose.msra.mxu0 0.0
        %319 = vmatpush.xpose.msra.mxu0 0.0
        %320 = vmatpush.xpose.msra.mxu0 0.0
        %321 = vmatpush.xpose.msra.mxu0 0.0
        %322 = vmatpush.xpose.msra.mxu0 0.0
        %323 = vmatpush.xpose.msra.mxu0 0.0
        %324 = vmatpush.xpose.msra.mxu0 0.0
        %325 = vmatpush.xpose.msra.mxu0 0.0
        %326 = vmatpush.xpose.msra.mxu0 0.0
        %327 = vmatpush.xpose.msra.mxu0 0.0
        %328 = vmatpush.xpose.msra.mxu0 0.0
        %329 = vmatpush.xpose.msra.mxu0 %v312
        %330 = vmatmul.f32.gmra.mxu0 %v310
        %v331 = vpop.f32.mrf.mxu0
        %v332 = vadd.f32 %v239, %v331
        %333 = vdwg.mxu0
        %v334 = vsel %vm268, %v332, -inf
        %335 = vmax.xlane.f32.xlu0 %v334
        %v336 = vpop.xlane.xlu0 %335
        %v337 = vsub.f32 %v332, %v336
        %v338 = vmul.f32 %v337, 1.442695
        %v339 = vpow.pop %v338
        %v340 = vsel %vm268, %v339, 0.0
        %341 = vadd.xlane.f32.xlu0 %v340
        %v342 = vpop.xlane.xlu0 %341
        %v343 = vrcp.pop %v342
        %v344 = vmul.f32 %v339, %v343
        %345 = vrot.lane.b32.xlu0 %v235, 88
        %v346 = vpop.permute.xlu0 %345
        %v349 = vsel %vm241, %v344, 0
        %351 = vmatpush.msra.mxu0 0.0
        %352 = vmatpush.msra.mxu0 0.0
        %353 = vmatpush.msra.mxu0 0.0
        %354 = vmatpush.msra.mxu0 0.0
        %355 = vmatpush.msra.mxu0 0.0
        %356 = vmatpush.msra.mxu0 0.0
        %357 = vmatpush.msra.mxu0 0.0
        %358 = vmatpush.msra.mxu0 0.0
        %359 = vmatpush.msra.mxu0 0.0
        %360 = vmatpush.msra.mxu0 0.0
        %361 = vmatpush.msra.mxu0 0.0
        %362 = vmatpush.msra.mxu0 0.0
        %363 = vmatpush.msra.mxu0 0.0
        %364 = vmatpush.msra.mxu0 0.0
        %365 = vmatpush.msra.mxu0 0.0
        %366 = vmatpush.msra.mxu0 %v346
        %367 = vmatmul.f32.gmra.mxu0 %v349
        %v368 = vpop.f32.mrf.mxu0
        %v369 = vadd.f32 0.0, %v368
        %370 = vdwg.mxu0
        %371 = vrot.lane.b32.xlu0 %v237, 112
        %v372 = vpop.permute.xlu0 %371
        %373 = vrot.lane.b32.xlu0 %v235, 112
        %v374 = vpop.permute.xlu0 %373
        %v375 = vsel %vm241, %v372, 0
        %v377 = vsel %vm241, %v374, 0
        %379 = vmatpush.xpose.msra.mxu0 0.0
        %380 = vmatpush.xpose.msra.mxu0 0.0
        %381 = vmatpush.xpose.msra.mxu0 0.0
        %382 = vmatpush.xpose.msra.mxu0 0.0
        %383 = vmatpush.xpose.msra.mxu0 0.0
        %384 = vmatpush.xpose.msra.mxu0 0.0
        %385 = vmatpush.xpose.msra.mxu0 0.0
        %386 = vmatpush.xpose.msra.mxu0 0.0
        %387 = vmatpush.xpose.msra.mxu0 0.0
        %388 = vmatpush.xpose.msra.mxu0 0.0
        %389 = vmatpush.xpose.msra.mxu0 0.0
        %390 = vmatpush.xpose.msra.mxu0 0.0
        %391 = vmatpush.xpose.msra.mxu0 0.0
        %392 = vmatpush.xpose.msra.mxu0 0.0
        %393 = vmatpush.xpose.msra.mxu0 0.0
        %394 = vmatpush.xpose.msra.mxu0 %v377
        %395 = vmatmul.f32.gmra.mxu0 %v375
        %v396 = vpop.f32.mrf.mxu0
        %v397 = vadd.f32 %v239, %v396
        %398 = vdwg.mxu0
        %v399 = vsel %vm268, %v397, -inf
        %400 = vmax.xlane.f32.xlu0 %v399
        %v401 = vpop.xlane.xlu0 %400
        %v402 = vsub.f32 %v397, %v401
        %v403 = vmul.f32 %v402, 1.442695
        %v404 = vpow.pop %v403
        %v405 = vsel %vm268, %v404, 0.0
        %406 = vadd.xlane.f32.xlu0 %v405
        %v407 = vpop.xlane.xlu0 %406
        %v408 = vrcp.pop %v407
        %v409 = vmul.f32 %v404, %v408
        %410 = vrot.lane.b32.xlu0 %v235, 80
        %v411 = vpop.permute.xlu0 %410
        %v414 = vsel %vm241, %v409, 0
        %416 = vmatpush.msra.mxu0 0.0
        %417 = vmatpush.msra.mxu0 0.0
        %418 = vmatpush.msra.mxu0 0.0
        %419 = vmatpush.msra.mxu0 0.0
        %420 = vmatpush.msra.mxu0 0.0
        %421 = vmatpush.msra.mxu0 0.0
        %422 = vmatpush.msra.mxu0 0.0
        %423 = vmatpush.msra.mxu0 0.0
        %424 = vmatpush.msra.mxu0 0.0
        %425 = vmatpush.msra.mxu0 0.0
        %426 = vmatpush.msra.mxu0 0.0
        %427 = vmatpush.msra.mxu0 0.0
        %428 = vmatpush.msra.mxu0 0.0
        %429 = vmatpush.msra.mxu0 0.0
        %430 = vmatpush.msra.mxu0 0.0
        %431 = vmatpush.msra.mxu0 %v411
        %432 = vmatmul.f32.gmra.mxu0 %v414
        %v433 = vpop.f32.mrf.mxu0
        %v434 = vadd.f32 0.0, %v433
        %435 = vdwg.mxu0
        %436 = vrot.lane.b32.xlu0 %v237, 104
        %v437 = vpop.permute.xlu0 %436
        %438 = vrot.lane.b32.xlu0 %v235, 104
        %v439 = vpop.permute.xlu0 %438
        %v440 = vsel %vm241, %v437, 0
        %v442 = vsel %vm241, %v439, 0
        %444 = vmatpush.xpose.msra.mxu0 0.0
        %445 = vmatpush.xpose.msra.mxu0 0.0
        %446 = vmatpush.xpose.msra.mxu0 0.0
        %447 = vmatpush.xpose.msra.mxu0 0.0
        %448 = vmatpush.xpose.msra.mxu0 0.0
        %449 = vmatpush.xpose.msra.mxu0 0.0
        %450 = vmatpush.xpose.msra.mxu0 0.0
        %451 = vmatpush.xpose.msra.mxu0 0.0
        %452 = vmatpush.xpose.msra.mxu0 0.0
        %453 = vmatpush.xpose.msra.mxu0 0.0
        %454 = vmatpush.xpose.msra.mxu0 0.0
        %455 = vmatpush.xpose.msra.mxu0 0.0
        %456 = vmatpush.xpose.msra.mxu0 0.0
        %457 = vmatpush.xpose.msra.mxu0 0.0
        %458 = vmatpush.xpose.msra.mxu0 0.0
        %459 = vmatpush.xpose.msra.mxu0 %v442
        %460 = vmatmul.f32.gmra.mxu0 %v440
        %v461 = vpop.f32.mrf.mxu0
        %v462 = vadd.f32 %v239, %v461
        %463 = vdwg.mxu0
        %v464 = vsel %vm268, %v462, -inf
        %465 = vmax.xlane.f32.xlu0 %v464
        %v466 = vpop.xlane.xlu0 %465
        %v467 = vsub.f32 %v462, %v466
        %v468 = vmul.f32 %v467, 1.442695
        %v469 = vpow.pop %v468
        %v470 = vsel %vm268, %v469, 0.0
        %471 = vadd.xlane.f32.xlu0 %v470
        %v472 = vpop.xlane.xlu0 %471
        %v473 = vrcp.pop %v472
        %v474 = vmul.f32 %v469, %v473
        %475 = vrot.lane.b32.xlu0 %v235, 72
        %v476 = vpop.permute.xlu0 %475
        %v479 = vsel %vm241, %v474, 0
        %481 = vmatpush.msra.mxu0 0.0
        %482 = vmatpush.msra.mxu0 0.0
        %483 = vmatpush.msra.mxu0 0.0
        %484 = vmatpush.msra.mxu0 0.0
        %485 = vmatpush.msra.mxu0 0.0
        %486 = vmatpush.msra.mxu0 0.0
        %487 = vmatpush.msra.mxu0 0.0
        %488 = vmatpush.msra.mxu0 0.0
        %489 = vmatpush.msra.mxu0 0.0
        %490 = vmatpush.msra.mxu0 0.0
        %491 = vmatpush.msra.mxu0 0.0
        %492 = vmatpush.msra.mxu0 0.0
        %493 = vmatpush.msra.mxu0 0.0
        %494 = vmatpush.msra.mxu0 0.0
        %495 = vmatpush.msra.mxu0 0.0
        %496 = vmatpush.msra.mxu0 %v476
        %497 = vmatmul.f32.gmra.mxu0 %v479
        %v498 = vpop.f32.mrf.mxu0
        %v499 = vadd.f32 0.0, %v498
        %500 = vdwg.mxu0
        %502 = vrot.lane.b32.xlu0 %v369, 8
        %v503 = vpop.permute.xlu0 %502
        %506 = vrot.lane.b32.xlu0 %v434, 16
        %v507 = vpop.permute.xlu0 %506
        %510 = vrot.lane.b32.xlu0 %v499, 24
        %v511 = vpop.permute.xlu0 %510
        %v513 = vsel %vm241, %v304, %v503
        %vm514 = vcmask 130048
        %v515 = vsel %vm514, %v513, %v507
        %vm516 = vcmask 195584
        %v517 = vsel %vm516, %v515, %v511
        %vm518 = vcmask 257024
        %519 = vst.msk [vmem:[%s216] sm:$0xf] %vm518, %v517
        %520 = vrot.lane.b32.xlu0 %v235, 64
        %v521 = vpop.permute.xlu0 %520
        %v522 = vsel %vm241, %v521, 0
        %524 = vmatpush.xpose.msra.mxu0 0.0
        %525 = vmatpush.xpose.msra.mxu0 0.0
        %526 = vmatpush.xpose.msra.mxu0 0.0
        %527 = vmatpush.xpose.msra.mxu0 0.0
        %528 = vmatpush.xpose.msra.mxu0 0.0
        %529 = vmatpush.xpose.msra.mxu0 0.0
        %530 = vmatpush.xpose.msra.mxu0 0.0
        %531 = vmatpush.xpose.msra.mxu0 0.0
        %532 = vmatpush.xpose.msra.mxu0 0.0
        %533 = vmatpush.xpose.msra.mxu0 0.0
        %534 = vmatpush.xpose.msra.mxu0 0.0
        %535 = vmatpush.xpose.msra.mxu0 0.0
        %536 = vmatpush.xpose.msra.mxu0 0.0
        %537 = vmatpush.xpose.msra.mxu0 0.0
        %538 = vmatpush.xpose.msra.mxu0 0.0
        %539 = vmatpush.xpose.msra.mxu0 %v246
        %540 = vmatmul.f32.gmra.mxu0 %v522
        %v541 = vpop.f32.mrf.mxu0
        %v542 = vadd.f32 %v239, %v541
        %543 = vdwg.mxu0
        %v544 = vsel %vm241, %v542, -inf
        %545 = vmax.xlane.f32.xlu0 %v544
        %v546 = vpop.xlane.xlu0 %545
        %v547 = vsub.f32 %v542, %v546
        %v548 = vmul.f32 %v547, 1.442695
        %v549 = vpow.pop %v548
        %v550 = vsel %vm241, %v549, 0.0
        %551 = vadd.xlane.f32.xlu0 %v550
        %v552 = vpop.xlane.xlu0 %551
        %v553 = vrcp.pop %v552
        %v554 = vmul.f32 %v549, %v553
        %v556 = vsel %vm241, %v554, 0
        %558 = vmatpush.msra.mxu0 0.0
        %559 = vmatpush.msra.mxu0 0.0
        %560 = vmatpush.msra.mxu0 0.0
        %561 = vmatpush.msra.mxu0 0.0
        %562 = vmatpush.msra.mxu0 0.0
        %563 = vmatpush.msra.mxu0 0.0
        %564 = vmatpush.msra.mxu0 0.0
        %565 = vmatpush.msra.mxu0 0.0
        %566 = vmatpush.msra.mxu0 0.0
        %567 = vmatpush.msra.mxu0 0.0
        %568 = vmatpush.msra.mxu0 0.0
        %569 = vmatpush.msra.mxu0 0.0
        %570 = vmatpush.msra.mxu0 0.0
        %571 = vmatpush.msra.mxu0 0.0
        %572 = vmatpush.msra.mxu0 0.0
        %573 = vmatpush.msra.mxu0 %v281
        %574 = vmatmul.f32.gmra.mxu0 %v556
        %v575 = vpop.f32.mrf.mxu0
        %v576 = vadd.f32 0.0, %v575
        %577 = vdwg.mxu0
        %578 = vrot.lane.b32.xlu0 %v235, 56
        %v579 = vpop.permute.xlu0 %578
        %v580 = vsel %vm241, %v579, 0
        %582 = vmatpush.xpose.msra.mxu0 0.0
        %583 = vmatpush.xpose.msra.mxu0 0.0
        %584 = vmatpush.xpose.msra.mxu0 0.0
        %585 = vmatpush.xpose.msra.mxu0 0.0
        %586 = vmatpush.xpose.msra.mxu0 0.0
        %587 = vmatpush.xpose.msra.mxu0 0.0
        %588 = vmatpush.xpose.msra.mxu0 0.0
        %589 = vmatpush.xpose.msra.mxu0 0.0
        %590 = vmatpush.xpose.msra.mxu0 0.0
        %591 = vmatpush.xpose.msra.mxu0 0.0
        %592 = vmatpush.xpose.msra.mxu0 0.0
        %593 = vmatpush.xpose.msra.mxu0 0.0
        %594 = vmatpush.xpose.msra.mxu0 0.0
        %595 = vmatpush.xpose.msra.mxu0 0.0
        %596 = vmatpush.xpose.msra.mxu0 0.0
        %597 = vmatpush.xpose.msra.mxu0 %v312
        %598 = vmatmul.f32.gmra.mxu0 %v580
        %v599 = vpop.f32.mrf.mxu0
        %v600 = vadd.f32 %v239, %v599
        %601 = vdwg.mxu0
        %v602 = vsel %vm241, %v600, -inf
        %603 = vmax.xlane.f32.xlu0 %v602
        %v604 = vpop.xlane.xlu0 %603
        %v605 = vsub.f32 %v600, %v604
        %v606 = vmul.f32 %v605, 1.442695
        %v607 = vpow.pop %v606
        %v608 = vsel %vm241, %v607, 0.0
        %609 = vadd.xlane.f32.xlu0 %v608
        %v610 = vpop.xlane.xlu0 %609
        %v611 = vrcp.pop %v610
        %v612 = vmul.f32 %v607, %v611
        %v614 = vsel %vm241, %v612, 0
        %616 = vmatpush.msra.mxu0 0.0
        %617 = vmatpush.msra.mxu0 0.0
        %618 = vmatpush.msra.mxu0 0.0
        %619 = vmatpush.msra.mxu0 0.0
        %620 = vmatpush.msra.mxu0 0.0
        %621 = vmatpush.msra.mxu0 0.0
        %622 = vmatpush.msra.mxu0 0.0
        %623 = vmatpush.msra.mxu0 0.0
        %624 = vmatpush.msra.mxu0 0.0
        %625 = vmatpush.msra.mxu0 0.0
        %626 = vmatpush.msra.mxu0 0.0
        %627 = vmatpush.msra.mxu0 0.0
        %628 = vmatpush.msra.mxu0 0.0
        %629 = vmatpush.msra.mxu0 0.0
        %630 = vmatpush.msra.mxu0 0.0
        %631 = vmatpush.msra.mxu0 %v346
        %632 = vmatmul.f32.gmra.mxu0 %v614
        %v633 = vpop.f32.mrf.mxu0
        %v634 = vadd.f32 0.0, %v633
        %635 = vdwg.mxu0
        %636 = vrot.lane.b32.xlu0 %v235, 48
        %v637 = vpop.permute.xlu0 %636
        %v638 = vsel %vm241, %v637, 0
        %640 = vmatpush.xpose.msra.mxu0 0.0
        %641 = vmatpush.xpose.msra.mxu0 0.0
        %642 = vmatpush.xpose.msra.mxu0 0.0
        %643 = vmatpush.xpose.msra.mxu0 0.0
        %644 = vmatpush.xpose.msra.mxu0 0.0
        %645 = vmatpush.xpose.msra.mxu0 0.0
        %646 = vmatpush.xpose.msra.mxu0 0.0
        %647 = vmatpush.xpose.msra.mxu0 0.0
        %648 = vmatpush.xpose.msra.mxu0 0.0
        %649 = vmatpush.xpose.msra.mxu0 0.0
        %650 = vmatpush.xpose.msra.mxu0 0.0
        %651 = vmatpush.xpose.msra.mxu0 0.0
        %652 = vmatpush.xpose.msra.mxu0 0.0
        %653 = vmatpush.xpose.msra.mxu0 0.0
        %654 = vmatpush.xpose.msra.mxu0 0.0
        %655 = vmatpush.xpose.msra.mxu0 %v377
        %656 = vmatmul.f32.gmra.mxu0 %v638
        %v657 = vpop.f32.mrf.mxu0
        %v658 = vadd.f32 %v239, %v657
        %659 = vdwg.mxu0
        %v660 = vsel %vm241, %v658, -inf
        %661 = vmax.xlane.f32.xlu0 %v660
        %v662 = vpop.xlane.xlu0 %661
        %v663 = vsub.f32 %v658, %v662
        %v664 = vmul.f32 %v663, 1.442695
        %v665 = vpow.pop %v664
        %v666 = vsel %vm241, %v665, 0.0
        %667 = vadd.xlane.f32.xlu0 %v666
        %v668 = vpop.xlane.xlu0 %667
        %v669 = vrcp.pop %v668
        %v670 = vmul.f32 %v665, %v669
        %v672 = vsel %vm241, %v670, 0
        %674 = vmatpush.msra.mxu0 0.0
        %675 = vmatpush.msra.mxu0 0.0
        %676 = vmatpush.msra.mxu0 0.0
        %677 = vmatpush.msra.mxu0 0.0
        %678 = vmatpush.msra.mxu0 0.0
        %679 = vmatpush.msra.mxu0 0.0
        %680 = vmatpush.msra.mxu0 0.0
        %681 = vmatpush.msra.mxu0 0.0
        %682 = vmatpush.msra.mxu0 0.0
        %683 = vmatpush.msra.mxu0 0.0
        %684 = vmatpush.msra.mxu0 0.0
        %685 = vmatpush.msra.mxu0 0.0
        %686 = vmatpush.msra.mxu0 0.0
        %687 = vmatpush.msra.mxu0 0.0
        %688 = vmatpush.msra.mxu0 0.0
        %689 = vmatpush.msra.mxu0 %v411
        %690 = vmatmul.f32.gmra.mxu0 %v672
        %v691 = vpop.f32.mrf.mxu0
        %v692 = vadd.f32 0.0, %v691
        %693 = vdwg.mxu0
        %694 = vrot.lane.b32.xlu0 %v235, 40
        %v695 = vpop.permute.xlu0 %694
        %v696 = vsel %vm241, %v695, 0
        %698 = vmatpush.xpose.msra.mxu0 0.0
        %699 = vmatpush.xpose.msra.mxu0 0.0
        %700 = vmatpush.xpose.msra.mxu0 0.0
        %701 = vmatpush.xpose.msra.mxu0 0.0
        %702 = vmatpush.xpose.msra.mxu0 0.0
        %703 = vmatpush.xpose.msra.mxu0 0.0
        %704 = vmatpush.xpose.msra.mxu0 0.0
        %705 = vmatpush.xpose.msra.mxu0 0.0
        %706 = vmatpush.xpose.msra.mxu0 0.0
        %707 = vmatpush.xpose.msra.mxu0 0.0
        %708 = vmatpush.xpose.msra.mxu0 0.0
        %709 = vmatpush.xpose.msra.mxu0 0.0
        %710 = vmatpush.xpose.msra.mxu0 0.0
        %711 = vmatpush.xpose.msra.mxu0 0.0
        %712 = vmatpush.xpose.msra.mxu0 0.0
        %713 = vmatpush.xpose.msra.mxu0 %v442
        %714 = vmatmul.f32.gmra.mxu0 %v696
        %v715 = vpop.f32.mrf.mxu0
        %v716 = vadd.f32 %v239, %v715
        %717 = vdwg.mxu0
        %v718 = vsel %vm241, %v716, -inf
        %719 = vmax.xlane.f32.xlu0 %v718
        %v720 = vpop.xlane.xlu0 %719
        %v721 = vsub.f32 %v716, %v720
        %v722 = vmul.f32 %v721, 1.442695
        %v723 = vpow.pop %v722
        %v724 = vsel %vm241, %v723, 0.0
        %725 = vadd.xlane.f32.xlu0 %v724
        %v726 = vpop.xlane.xlu0 %725
        %v727 = vrcp.pop %v726
        %v728 = vmul.f32 %v723, %v727
        %v730 = vsel %vm241, %v728, 0
        %732 = vmatpush.msra.mxu0 0.0
        %733 = vmatpush.msra.mxu0 0.0
        %734 = vmatpush.msra.mxu0 0.0
        %735 = vmatpush.msra.mxu0 0.0
        %736 = vmatpush.msra.mxu0 0.0
        %737 = vmatpush.msra.mxu0 0.0
        %738 = vmatpush.msra.mxu0 0.0
        %739 = vmatpush.msra.mxu0 0.0
        %740 = vmatpush.msra.mxu0 0.0
        %741 = vmatpush.msra.mxu0 0.0
        %742 = vmatpush.msra.mxu0 0.0
        %743 = vmatpush.msra.mxu0 0.0
        %744 = vmatpush.msra.mxu0 0.0
        %745 = vmatpush.msra.mxu0 0.0
        %746 = vmatpush.msra.mxu0 0.0
        %747 = vmatpush.msra.mxu0 %v476
        %748 = vmatmul.f32.gmra.mxu0 %v730
        %v749 = vpop.f32.mrf.mxu0
        %v750 = vadd.f32 0.0, %v749
        %751 = vdwg.mxu0
        %753 = vrot.lane.b32.xlu0 %v634, 8
        %v754 = vpop.permute.xlu0 %753
        %757 = vrot.lane.b32.xlu0 %v692, 16
        %v758 = vpop.permute.xlu0 %757
        %761 = vrot.lane.b32.xlu0 %v750, 24
        %v762 = vpop.permute.xlu0 %761
        %v764 = vsel %vm241, %v576, %v754
        %v765 = vsel %vm514, %v764, %v758
        %v766 = vsel %vm516, %v765, %v762
        %vm767 = vcmask 261120
        %768 = vst.msk [vmem:[%s223] sm:$0xff] %vm767, %v766
        %s769 = sand.u32 %s108, 1
        %s770 = scalar_lea.sflag [#allocation3], %s769
        %s771 = sand.u32 %s108, 1
        %s772 = smul.addr %s771, 4
        %s773 = scalar_lea.vmem [#allocation2], %s772
        %s774 = sand.u32 %s134, 1
        %s775 = scalar_lea.sflag [#allocation5], %s774
        %s776 = sand.u32 %s134, 1
        %s777 = smul.addr %s776, 8
        %s778 = scalar_lea.vmem [#allocation4], %s777
        // Predicated region
        $region33: #{m2dpr_cross_attention.5} parent=31 // pred_check
          %p779 = pneg %p118
        $region34: #{m2dpr_cross_attention.5} parent=31 // pred_check_branch
          %781 = sbr.rel (%p779) target = $region36
        $region35: #{m2dpr_cross_attention.5} parent=31 // pred_region
          %783 = vsyncadd %s770, 0
          %s784 = smul.addr %s22, 4
          %s785 = scalar_lea.hbm %s3, %s784
          %s787 = sshll.u32 %s773, 4
          %s788 = int_to_ptr.vmem [resolvable:$true] %s787
          %s789 = sshll.u32 %s785, 4
          %s790 = int_to_ptr.hbm [resolvable:$true] %s789
          %792 = dma.vmem_to_hbm [thread:$0]  %s788, 64, %s790, %s770
        $region36: #{m2dpr_cross_attention.5} parent=31 // pred_fallthru
          _
        // Predicated region
        $region37: #{m2dpr_cross_attention.5} parent=31 // pred_check
          %p793 = pneg %p144
        $region38: #{m2dpr_cross_attention.5} parent=31 // pred_check_branch
          %795 = sbr.rel (%p793) target = $region40
        $region39: #{m2dpr_cross_attention.5} parent=31 // pred_region
          %797 = vsyncadd %s775, 0
          %s798 = smul.addr %s22, 8
          %s799 = scalar_lea.hbm %s4, %s798
          %s801 = sshll.u32 %s778, 4
          %s802 = int_to_ptr.vmem [resolvable:$true] %s801
          %s803 = sshll.u32 %s799, 4
          %s804 = int_to_ptr.hbm [resolvable:$true] %s803
          %806 = dma.vmem_to_hbm [thread:$0]  %s802, 128, %s804, %s775
        $region40: #{m2dpr_cross_attention.5} parent=31 // pred_fallthru
          _
      $region32: #{m2dpr_cross_attention.5} parent=5 // pred_fallthru
        _
      %p807 = scmp.le.s32.totalorder 2, %s17
      // Predicated region
      $region41: #{m2dpr_cross_attention.5} parent=5 // pred_check
        %p808 = pneg %p807
      $region42: #{m2dpr_cross_attention.5} parent=5 // pred_check_branch
        %810 = sbr.rel (%p808) target = $region44
      $region43: #{m2dpr_cross_attention.5} parent=5 // pred_region
        %s811 = ssub.s32 %s17, 2
        // Predicated region
        $region45: #{m2dpr_cross_attention.5} parent=43 // pred_check
          %p812 = pneg %p124
        $region46: #{m2dpr_cross_attention.5} parent=43 // pred_check_branch
          %814 = sbr.rel (%p812) target = $region48
        $region47: #{m2dpr_cross_attention.5} parent=43 // pred_region
          %s815 = sand.u32 %s109, 1
          %s816 = scalar_lea.sflag [#allocation3], %s815
          %s817 = sand.u32 %s109, 1
          %s818 = smul.addr %s817, 4
          %s819 = scalar_lea.vmem [#allocation2], %s818
          %821 = dma.done %s816, 64
        $region48: #{m2dpr_cross_attention.5} parent=43 // pred_fallthru
          _
        // Predicated region
        $region49: #{m2dpr_cross_attention.5} parent=43 // pred_check
          %p822 = pneg %p150
        $region50: #{m2dpr_cross_attention.5} parent=43 // pred_check_branch
          %824 = sbr.rel (%p822) target = $region52
        $region51: #{m2dpr_cross_attention.5} parent=43 // pred_region
          %s825 = sand.u32 %s135, 1
          %s826 = scalar_lea.sflag [#allocation5], %s825
          %s827 = sand.u32 %s135, 1
          %s828 = smul.addr %s827, 8
          %s829 = scalar_lea.vmem [#allocation4], %s828
          %831 = dma.done %s826, 128
        $region52: #{m2dpr_cross_attention.5} parent=43 // pred_fallthru
          _
      $region44: #{m2dpr_cross_attention.5} parent=5 // pred_fallthru
        _
    $region6: #{m2dpr_cross_attention.5} parent=1 // loop_footer
      %s21 = sadd.s32 1, %s17
    $region7: #{m2dpr_cross_attention.5} parent=1 // loop_footer_branch
      %16 = sbr.rel target = $region3
    $region8: #{m2dpr_cross_attention.5} parent=1 // loop_exit
      _
    %832 = vsyncpa [#allocation3], 1
    %s833 = scalar_lea.sflag [#allocation3], 1
    %834 = vsyncpa %s833, 1
    %835 = vsyncpa [#allocation5], 1
    %s836 = scalar_lea.sflag [#allocation5], 1
    %837 = vsyncpa %s836, 1

</llo_original>
